<compile_context>
chip_gen: v5e
topology: v5e:2x2
jax: 0.10.0
libtpu: 0.0.40
codegen_flags: <defaults>
</compile_context>

<pallas_src>
import jax
import jax.numpy as jnp
import numpy as np
from jax.experimental import pallas as pl
from jax.experimental.pallas import tpu as pltpu

HEADS = 1            # module constant (GATConv heads)
DIM = 256            # module constant: GAT output dim
LSTM_HIDDEN = 256    # module constant: LSTM hidden size
NEG_BIAS = -1e9      # additive non-edge bias (exp underflows to exactly 0 in fp32)


def _geniepath_kernel(hlin_ref, a_dst_ref, a_src_ref, adj_bias_ref, bias_gat_ref,
                      w_ih_ref, w_hh_ref, h_prev_ref, c_prev_ref,
                      h_out_ref, c_out_ref):
    """grid = (node-row tiles ["parallel"],). One grid step does the full GAT row-tile
    attention + one LSTM step over all 4H gate columns (weights resident in VMEM)."""
    # ---------------- Breadth: GATConv(heads=1) attention for this row tile ----------------
    # e[i, j] = leaky_relu(a_dst[i] + a_src[j]) + adj_bias[i, j]
    e = a_dst_ref[...] + a_src_ref[...]                        # (Tn, N) f32
    e = jnp.where(e > 0, e, 0.2 * e)                           # leaky_relu(0.2)
    e = e + adj_bias_ref[...].astype(jnp.float32)              # 0 on edges, -1e9 otherwise
    m = jnp.max(e, axis=-1, keepdims=True)                     # f32 max (keeps exp safe)
    p = jnp.exp(e - m)                                         # non-edges underflow to 0
    # un-normalized aggregation on the MXU in bf16 (f32 accumulate), normalize afterwards
    gat_un = jnp.dot(p.astype(jnp.bfloat16), hlin_ref[...],
                     preferred_element_type=jnp.float32)       # (Tn, DIM)
    rowsum = jnp.sum(p, axis=-1, keepdims=True)                # (Tn, 1)
    inv = pl.reciprocal(rowsum, approx=True)                   # EUP, off the VPU divide path
    xb = jnp.tanh(gat_un * inv + bias_gat_ref[...])            # (Tn, DIM) f32
    xb_bf = xb.astype(jnp.bfloat16)

    # ---------------- Depth: one LSTM step (bias=False), all 4H gate columns ----------------
    h_bf = h_prev_ref[...].astype(jnp.bfloat16)
    gates = (jnp.dot(xb_bf, w_ih_ref[...], preferred_element_type=jnp.float32) +
             jnp.dot(h_bf, w_hh_ref[...], preferred_element_type=jnp.float32))   # (Tn, 4H)
    H = LSTM_HIDDEN
    i_g = jax.nn.sigmoid(gates[:, 0 * H:1 * H])
    f_g = jax.nn.sigmoid(gates[:, 1 * H:2 * H])
    g_g = jnp.tanh(gates[:, 2 * H:3 * H])
    o_g = jax.nn.sigmoid(gates[:, 3 * H:4 * H])
    c_new = f_g * c_prev_ref[...] + i_g * g_g
    h_out_ref[...] = o_g * jnp.tanh(c_new)
    c_out_ref[...] = c_new


def _round_up(n, m):
    return ((n + m - 1) // m) * m


@jax.jit
def geniepath_layer(x, edge_index, h, c, params):
    """x: (N, in_dim) f32; edge_index: (2, E) int32 (unique edges j -> i);
    h, c: (1, N, LSTM_HIDDEN). Returns (x_out (N, DIM), (h_new, c_new))."""
    N, in_dim = x.shape

    # node-row tiling ("parallel" grid axis). Small graphs are split into two row tiles
    # so both v7x TensorCores are fed; large graphs use 256-row tiles for the 256-wide MXU.
    n_pad0 = _round_up(N, 8)
    if n_pad0 <= 256:
        tile_n = max(8, _round_up((n_pad0 + 1) // 2, 8))
        n_pad = _round_up(n_pad0, tile_n)
    else:
        tile_n = 256
        n_pad = _round_up(n_pad0, tile_n)
    nb = n_pad // tile_n

    # Additive attention bias: 0 for edge j -> i at [i, j] and on self loops, -1e9 else.
    # TODO(synk): dense mask dedups duplicate edges; PyG GATConv softmaxes per-edge.
    # TODO(synk): for N beyond a few thousand, replace the dense O(N^2) bias with CSR /
    # blocked edge structure via PrefetchScalarGridSpec (scalar-prefetch row pointers).
    src, dst = edge_index[0], edge_index[1]
    adj_bias = jnp.full((n_pad, n_pad), NEG_BIAS, jnp.float32)
    adj_bias = adj_bias.at[dst, src].set(0.0)
    diag = jnp.arange(n_pad)
    adj_bias = adj_bias.at[diag, diag].set(0.0)            # GATConv adds self loops
    adj_bias = adj_bias.astype(jnp.bfloat16)               # halves O(N^2) mask bytes

    def pad_rows(a):
        return a if a.shape[0] == n_pad else jnp.pad(a, ((0, n_pad - a.shape[0]), (0, 0)))

    x_p = pad_rows(x)
    h_p = pad_rows(h[0])
    c_p = pad_rows(c[0])

    # Hoisted breadth prologue: computed once (not per row tile) in XLA.
    hlin = jnp.dot(x_p, params['w_gat'], preferred_element_type=jnp.float32)   # (N, DIM) f32
    a_dst = jnp.dot(hlin, params['att_dst'].T,
                    preferred_element_type=jnp.float32)                        # (N, 1)
    a_src = jnp.dot(params['att_src'], hlin.T,
                    preferred_element_type=jnp.float32)                        # (1, N)
    hlin_bf = hlin.astype(jnp.bfloat16)                                        # kernel input

    w_ih_bf = params['w_ih_t'].astype(jnp.bfloat16)        # (DIM, 4H), gate order i|f|g|o
    w_hh_bf = params['w_hh_t'].astype(jnp.bfloat16)        # (H, 4H)

    in_specs = [
        pl.BlockSpec((n_pad, DIM), lambda b: (0, 0)),               # hlin (bf16), all nodes
        pl.BlockSpec((tile_n, 1), lambda b: (b, 0)),                # a_dst rows of this tile
        pl.BlockSpec((1, n_pad), lambda b: (0, 0)),                 # a_src, all source nodes
        pl.BlockSpec((tile_n, n_pad), lambda b: (b, 0)),            # additive adjacency bias
        pl.BlockSpec((1, DIM), lambda b: (0, 0)),                   # bias_gat
        pl.BlockSpec((DIM, 4 * LSTM_HIDDEN), lambda b: (0, 0)),     # w_ih (bf16, resident)
        pl.BlockSpec((LSTM_HIDDEN, 4 * LSTM_HIDDEN), lambda b: (0, 0)),  # w_hh (bf16, resident)
        pl.BlockSpec((tile_n, LSTM_HIDDEN), lambda b: (b, 0)),      # h_prev rows
        pl.BlockSpec((tile_n, LSTM_HIDDEN), lambda b: (b, 0)),      # c_prev rows
    ]
    out_specs = (
        pl.BlockSpec((tile_n, LSTM_HIDDEN), lambda b: (b, 0)),      # h_out (lane-dense 256)
        pl.BlockSpec((tile_n, LSTM_HIDDEN), lambda b: (b, 0)),      # c_out
    )
    out_shape = (
        jax.ShapeDtypeStruct((n_pad, LSTM_HIDDEN), jnp.float32),
        jax.ShapeDtypeStruct((n_pad, LSTM_HIDDEN), jnp.float32),
    )

    h_out, c_out = pl.pallas_call(
        _geniepath_kernel,
        out_shape=out_shape,
        grid=(nb,),
        in_specs=in_specs,
        out_specs=out_specs,
        input_output_aliases={7: 0, 8: 1},                          # h, c updated in place
        compiler_params=pltpu.CompilerParams(
            dimension_semantics=("parallel",),
            vmem_limit_bytes=48 * 1024 * 1024),
    )(hlin_bf, a_dst, a_src, adj_bias, params['bias_gat'],
      w_ih_bf, w_hh_bf, h_p, c_p)

    h_new = h_out[:N]
    c_new = c_out[:N]
    # single-timestep LSTM output == h_new: x_out aliases h_new (no extra HBM writeback)
    return h_new, (h_new[None], c_new[None])


def _reference(x, edge_index, h, c, params, mixed=False):
    """Pure-JAX reference (GATConv heads=1 + tanh + one LSTM step). With mixed=True it
    mirrors the kernel's bf16 aggregation / gate matmuls (f32 accumulate)."""
    N = x.shape[0]
    src, dst = edge_index[0], edge_index[1]
    bias = jnp.full((N, N), NEG_BIAS, jnp.float32)
    bias = bias.at[dst, src].set(0.0)
    bias = bias.at[jnp.arange(N), jnp.arange(N)].set(0.0)

    hlin = x @ params['w_gat']
    a_dst = hlin @ params['att_dst'].T            # (N, 1)
    a_src = params['att_src'] @ hlin.T            # (1, N)
    e = a_dst + a_src
    e = jnp.where(e > 0, e, 0.2 * e) + bias
    p = jnp.exp(e - e.max(-1, keepdims=True))
    if mixed:
        gat_un = jnp.dot(p.astype(jnp.bfloat16), hlin.astype(jnp.bfloat16),
                         preferred_element_type=jnp.float32)
        gat = gat_un / p.sum(-1, keepdims=True)
    else:
        attn = p / p.sum(-1, keepdims=True)
        gat = attn @ hlin
    xb = jnp.tanh(gat + params['bias_gat'])

    mm_dtype = jnp.bfloat16 if mixed else jnp.float32
    gates = (jnp.dot(xb.astype(mm_dtype), params['w_ih_t'].astype(mm_dtype),
                     preferred_element_type=jnp.float32) +
             jnp.dot(h[0].astype(mm_dtype), params['w_hh_t'].astype(mm_dtype),
                     preferred_element_type=jnp.float32))
    H = LSTM_HIDDEN
    i_g = jax.nn.sigmoid(gates[:, :H])
    f_g = jax.nn.sigmoid(gates[:, H:2 * H])
    g_g = jnp.tanh(gates[:, 2 * H:3 * H])
    o_g = jax.nn.sigmoid(gates[:, 3 * H:])
    c_new = f_g * c[0] + i_g * g_g
    h_new = o_g * jnp.tanh(c_new)
    return h_new, (h_new[None], c_new[None])


if __name__ == "__main__":
    N = 16       # number of graph nodes (LSTM "batch")
    IN_DIM = 32  # GeniePathLayer(in_dim)

    key = jax.random.PRNGKey(0)
    ks = jax.random.split(key, 9)

    # shapes from GATConv(in_dim, 256, heads=1) and nn.LSTM(256, 256, 1, bias=False);
    # weights stored pre-transposed for x @ W, gate columns ordered i, f, g, o.
    params = {
        'w_gat':    0.1 * jax.random.normal(ks[0], (IN_DIM, DIM), jnp.float32),
        'att_src':  0.1 * jax.random.normal(ks[1], (1, DIM), jnp.float32),
        'att_dst':  0.1 * jax.random.normal(ks[2], (1, DIM), jnp.float32),
        'bias_gat': 0.1 * jax.random.normal(ks[3], (1, DIM), jnp.float32),
        'w_ih_t':   0.1 * jax.random.normal(ks[4], (DIM, 4 * LSTM_HIDDEN), jnp.float32),
        'w_hh_t':   0.1 * jax.random.normal(ks[5], (LSTM_HIDDEN, 4 * LSTM_HIDDEN), jnp.float32),
    }

    x = jax.random.normal(ks[6], (N, IN_DIM), jnp.float32)
    ring = jnp.arange(N, dtype=jnp.int32)
    edge_index = jnp.stack([
        jnp.concatenate([ring, (ring + 1) % N]),
        jnp.concatenate([(ring + 1) % N, ring]),
    ])  # (2, 2N), unique edges j -> i
    h0 = 0.1 * jax.random.normal(ks[7], (1, N, LSTM_HIDDEN), jnp.float32)
    c0 = 0.1 * jax.random.normal(ks[8], (1, N, LSTM_HIDDEN), jnp.float32)

    # references first (kernel aliases the h/c buffers)
    x_f32, (h_f32, c_f32) = _reference(x, edge_index, h0, c0, params, mixed=False)
    x_bf, (h_bf, c_bf) = _reference(x, edge_index, h0, c0, params, mixed=True)
    jax.block_until_ready((x_f32, x_bf))

    x_out, (h_new, c_new) = geniepath_layer(x, edge_index, h0, c0, params)
    jax.block_until_ready((x_out, h_new, c_new))

    # tight check vs a reference mirroring the kernel's bf16 aggregation / gate matmuls
    np.testing.assert_allclose(np.asarray(x_out), np.asarray(x_bf), rtol=5e-3, atol=5e-3)
    np.testing.assert_allclose(np.asarray(h_new), np.asarray(h_bf), rtol=5e-3, atol=5e-3)
    np.testing.assert_allclose(np.asarray(c_new), np.asarray(c_bf), rtol=5e-3, atol=5e-3)
    # loose check vs pure-fp32 module semantics (budget for bf16 weight/activation cast)
    np.testing.assert_allclose(np.asarray(x_out), np.asarray(x_f32), rtol=2.5e-2, atol=2.5e-2)
    np.testing.assert_allclose(np.asarray(h_new), np.asarray(h_f32), rtol=2.5e-2, atol=2.5e-2)
    np.testing.assert_allclose(np.asarray(c_new), np.asarray(c_f32), rtol=2.5e-2, atol=2.5e-2)

    print("KERNEL_OK")
</pallas_src>

<mosaic_0001>
module attributes {stable_mosaic.version = 11 : i64} {
  func.func @_geniepath_kernel(%arg0: i32, %arg1: memref<16x256xbf16, #tpu.memory_space<vmem>>, %arg2: memref<8x1xf32, #tpu.memory_space<vmem>>, %arg3: memref<1x16xf32, #tpu.memory_space<vmem>>, %arg4: memref<8x16xbf16, #tpu.memory_space<vmem>>, %arg5: memref<1x256xf32, #tpu.memory_space<vmem>>, %arg6: memref<256x1024xbf16, #tpu.memory_space<vmem>>, %arg7: memref<256x1024xbf16, #tpu.memory_space<vmem>>, %arg8: memref<8x256xf32, #tpu.memory_space<vmem>>, %arg9: memref<8x256xf32, #tpu.memory_space<vmem>>, %arg10: memref<8x256xf32, #tpu.memory_space<vmem>>, %arg11: memref<8x256xf32, #tpu.memory_space<vmem>>) attributes {dimension_semantics = [#tpu.dimension_semantics<parallel>], iteration_bounds = array<i64: 2>, scalar_prefetch = 0 : i64, scratch_operands = 0 : i64, tpu.core_type = #tpu.core_type<tc>, window_params = [{pipeline_mode = #tpu.pipeline_mode<synchronous>, transform_indices = @transform_0, window_bounds = array<i64: 16, 256>}, {transform_indices = @transform_1, window_bounds = array<i64: 8, 1>}, {pipeline_mode = #tpu.pipeline_mode<synchronous>, transform_indices = @transform_2, window_bounds = array<i64: 1, 16>}, {transform_indices = @transform_3, window_bounds = array<i64: 8, 16>}, {pipeline_mode = #tpu.pipeline_mode<synchronous>, transform_indices = @transform_4, window_bounds = array<i64: 1, 256>}, {pipeline_mode = #tpu.pipeline_mode<synchronous>, transform_indices = @transform_5, window_bounds = array<i64: 256, 1024>}, {pipeline_mode = #tpu.pipeline_mode<synchronous>, transform_indices = @transform_6, window_bounds = array<i64: 256, 1024>}, {transform_indices = @transform_7, window_bounds = array<i64: 8, 256>}, {transform_indices = @transform_8, window_bounds = array<i64: 8, 256>}, {transform_indices = @transform_9, window_bounds = array<i64: 8, 256>}, {transform_indices = @transform_10, window_bounds = array<i64: 8, 256>}]} {
    %c0 = arith.constant 0 : index
    %c0_0 = arith.constant 0 : index
    %0 = vector.load %arg2[%c0, %c0_0] : memref<8x1xf32, #tpu.memory_space<vmem>>, vector<8x1xf32>
    %c0_1 = arith.constant 0 : index
    %c0_2 = arith.constant 0 : index
    %1 = vector.load %arg3[%c0_1, %c0_2] : memref<1x16xf32, #tpu.memory_space<vmem>>, vector<1x16xf32>
    %2 = vector.broadcast %0 : vector<8x1xf32> to vector<8x16xf32>
    %3 = vector.broadcast %1 : vector<1x16xf32> to vector<8x16xf32>
    %4 = arith.addf %2, %3 : vector<8x16xf32>
    %cst = arith.constant 0.000000e+00 : f32
    %5 = vector.broadcast %cst : f32 to vector<8x16xf32>
    %6 = arith.cmpf ogt, %4, %5 : vector<8x16xf32>
    %cst_3 = arith.constant 2.000000e-01 : f32
    %7 = vector.broadcast %cst_3 : f32 to vector<8x16xf32>
    %8 = arith.mulf %7, %4 : vector<8x16xf32>
    %9 = arith.select %6, %4, %8 : vector<8x16xi1>, vector<8x16xf32>
    %c0_4 = arith.constant 0 : index
    %c0_5 = arith.constant 0 : index
    %10 = vector.load %arg4[%c0_4, %c0_5] : memref<8x16xbf16, #tpu.memory_space<vmem>>, vector<8x16xbf16>
    %11 = arith.extf %10 : vector<8x16xbf16> to vector<8x16xf32>
    %12 = arith.addf %9, %11 : vector<8x16xf32>
    %cst_6 = arith.constant dense<0xFF800000> : vector<8xf32>
    %13 = vector.multi_reduction <maximumf>, %12, %cst_6 [1] : vector<8x16xf32> to vector<8xf32>
    %14 = vector.shape_cast %13 : vector<8xf32> to vector<8x1xf32>
    %15 = vector.broadcast %14 : vector<8x1xf32> to vector<8x16xf32>
    %16 = arith.subf %12, %15 : vector<8x16xf32>
    %17 = math.exp %16 : vector<8x16xf32>
    %18 = arith.truncf %17 : vector<8x16xf32> to vector<8x16xbf16>
    %c0_7 = arith.constant 0 : index
    %c0_8 = arith.constant 0 : index
    %19 = vector.load %arg1[%c0_7, %c0_8] : memref<16x256xbf16, #tpu.memory_space<vmem>>, vector<16x256xbf16>
    %cst_9 = arith.constant dense<0.000000e+00> : vector<8x256xf32>
    %20 = tpu.matmul %18, %19, %cst_9 {dimension_numbers = #tpu.dot_dimension_numbers<[1], [0], [0], [1], [0, 0, 1, 1], [], []>} : vector<8x16xbf16>, vector<16x256xbf16>, vector<8x256xf32> -> vector<8x256xf32>
    %cst_10 = arith.constant dense<0.000000e+00> : vector<8xf32>
    %21 = vector.multi_reduction <add>, %17, %cst_10 [1] : vector<8x16xf32> to vector<8xf32>
    %22 = vector.shape_cast %21 : vector<8xf32> to vector<8x1xf32>
    %23 = tpu.reciprocal %22 {approx = true} : vector<8x1xf32> -> vector<8x1xf32>
    %24 = vector.broadcast %23 : vector<8x1xf32> to vector<8x256xf32>
    %25 = arith.mulf %20, %24 : vector<8x256xf32>
    %c0_11 = arith.constant 0 : index
    %c0_12 = arith.constant 0 : index
    %26 = vector.load %arg5[%c0_11, %c0_12] : memref<1x256xf32, #tpu.memory_space<vmem>>, vector<1x256xf32>
    %27 = vector.broadcast %26 : vector<1x256xf32> to vector<8x256xf32>
    %28 = arith.addf %25, %27 : vector<8x256xf32>
    %29 = math.tanh %28 : vector<8x256xf32>
    %30 = arith.truncf %29 : vector<8x256xf32> to vector<8x256xbf16>
    %c0_13 = arith.constant 0 : index
    %c0_14 = arith.constant 0 : index
    %31 = vector.load %arg8[%c0_13, %c0_14] : memref<8x256xf32, #tpu.memory_space<vmem>>, vector<8x256xf32>
    %32 = arith.truncf %31 : vector<8x256xf32> to vector<8x256xbf16>
    %c0_15 = arith.constant 0 : index
    %c0_16 = arith.constant 0 : index
    %33 = vector.load %arg6[%c0_15, %c0_16] : memref<256x1024xbf16, #tpu.memory_space<vmem>>, vector<256x1024xbf16>
    %cst_17 = arith.constant dense<0.000000e+00> : vector<8x1024xf32>
    %34 = tpu.matmul %30, %33, %cst_17 {dimension_numbers = #tpu.dot_dimension_numbers<[1], [0], [0], [1], [0, 0, 1, 1], [], []>} : vector<8x256xbf16>, vector<256x1024xbf16>, vector<8x1024xf32> -> vector<8x1024xf32>
    %c0_18 = arith.constant 0 : index
    %c0_19 = arith.constant 0 : index
    %35 = vector.load %arg7[%c0_18, %c0_19] : memref<256x1024xbf16, #tpu.memory_space<vmem>>, vector<256x1024xbf16>
    %cst_20 = arith.constant dense<0.000000e+00> : vector<8x1024xf32>
    %36 = tpu.matmul %32, %35, %cst_20 {dimension_numbers = #tpu.dot_dimension_numbers<[1], [0], [0], [1], [0, 0, 1, 1], [], []>} : vector<8x256xbf16>, vector<256x1024xbf16>, vector<8x1024xf32> -> vector<8x1024xf32>
    %37 = arith.addf %34, %36 : vector<8x1024xf32>
    %38 = vector.extract_strided_slice %37 {offsets = [0, 0], sizes = [8, 256], strides = [1, 1]} : vector<8x1024xf32> to vector<8x256xf32>
    %39 = arith.negf %38 : vector<8x256xf32>
    %40 = math.exp %39 : vector<8x256xf32>
    %cst_21 = arith.constant 1.000000e+00 : f32
    %41 = vector.broadcast %cst_21 : f32 to vector<8x256xf32>
    %42 = arith.addf %41, %40 : vector<8x256xf32>
    %43 = arith.divf %41, %42 : vector<8x256xf32>
    %44 = vector.extract_strided_slice %37 {offsets = [0, 256], sizes = [8, 256], strides = [1, 1]} : vector<8x1024xf32> to vector<8x256xf32>
    %45 = arith.negf %44 : vector<8x256xf32>
    %46 = math.exp %45 : vector<8x256xf32>
    %cst_22 = arith.constant 1.000000e+00 : f32
    %47 = vector.broadcast %cst_22 : f32 to vector<8x256xf32>
    %48 = arith.addf %47, %46 : vector<8x256xf32>
    %49 = arith.divf %47, %48 : vector<8x256xf32>
    %50 = vector.extract_strided_slice %37 {offsets = [0, 512], sizes = [8, 256], strides = [1, 1]} : vector<8x1024xf32> to vector<8x256xf32>
    %51 = math.tanh %50 : vector<8x256xf32>
    %52 = vector.extract_strided_slice %37 {offsets = [0, 768], sizes = [8, 256], strides = [1, 1]} : vector<8x1024xf32> to vector<8x256xf32>
    %53 = arith.negf %52 : vector<8x256xf32>
    %54 = math.exp %53 : vector<8x256xf32>
    %cst_23 = arith.constant 1.000000e+00 : f32
    %55 = vector.broadcast %cst_23 : f32 to vector<8x256xf32>
    %56 = arith.addf %55, %54 : vector<8x256xf32>
    %57 = arith.divf %55, %56 : vector<8x256xf32>
    %c0_24 = arith.constant 0 : index
    %c0_25 = arith.constant 0 : index
    %58 = vector.load %arg9[%c0_24, %c0_25] : memref<8x256xf32, #tpu.memory_space<vmem>>, vector<8x256xf32>
    %59 = arith.mulf %49, %58 : vector<8x256xf32>
    %60 = arith.mulf %43, %51 : vector<8x256xf32>
    %61 = arith.addf %59, %60 : vector<8x256xf32>
    %62 = math.tanh %61 : vector<8x256xf32>
    %63 = arith.mulf %57, %62 : vector<8x256xf32>
    %c0_26 = arith.constant 0 : index
    %c0_27 = arith.constant 0 : index
    %64 = vector.load %arg10[%c0_26, %c0_27] : memref<8x256xf32, #tpu.memory_space<vmem>>, vector<8x256xf32>
    tpu.vector_store %arg10[%c0_26, %c0_27], %63 {strides = array<i32>} : memref<8x256xf32, #tpu.memory_space<vmem>>, vector<8x256xf32>,
    %c0_28 = arith.constant 0 : index
    %c0_29 = arith.constant 0 : index
    %65 = vector.load %arg11[%c0_28, %c0_29] : memref<8x256xf32, #tpu.memory_space<vmem>>, vector<8x256xf32>
    tpu.vector_store %arg11[%c0_28, %c0_29], %61 {strides = array<i32>} : memref<8x256xf32, #tpu.memory_space<vmem>>, vector<8x256xf32>,
    return
  }
  func.func @transform_0(%arg0: i32) -> (i32, i32) {
    %c0_i32 = arith.constant 0 : i32
    %c0_i32_0 = arith.constant 0 : i32
    %c0_i32_1 = arith.constant 0 : i32
    return %c0_i32, %c0_i32_0 : i32, i32
  }
  func.func @transform_1(%arg0: i32) -> (i32, i32) {
    %c0_i32 = arith.constant 0 : i32
    %c0_i32_0 = arith.constant 0 : i32
    return %arg0, %c0_i32 : i32, i32
  }
  func.func @transform_2(%arg0: i32) -> (i32, i32) {
    %c0_i32 = arith.constant 0 : i32
    %c0_i32_0 = arith.constant 0 : i32
    %c0_i32_1 = arith.constant 0 : i32
    return %c0_i32, %c0_i32_0 : i32, i32
  }
  func.func @transform_3(%arg0: i32) -> (i32, i32) {
    %c0_i32 = arith.constant 0 : i32
    %c0_i32_0 = arith.constant 0 : i32
    return %arg0, %c0_i32 : i32, i32
  }
  func.func @transform_4(%arg0: i32) -> (i32, i32) {
    %c0_i32 = arith.constant 0 : i32
    %c0_i32_0 = arith.constant 0 : i32
    %c0_i32_1 = arith.constant 0 : i32
    return %c0_i32, %c0_i32_0 : i32, i32
  }
  func.func @transform_5(%arg0: i32) -> (i32, i32) {
    %c0_i32 = arith.constant 0 : i32
    %c0_i32_0 = arith.constant 0 : i32
    %c0_i32_1 = arith.constant 0 : i32
    return %c0_i32, %c0_i32_0 : i32, i32
  }
  func.func @transform_6(%arg0: i32) -> (i32, i32) {
    %c0_i32 = arith.constant 0 : i32
    %c0_i32_0 = arith.constant 0 : i32
    %c0_i32_1 = arith.constant 0 : i32
    return %c0_i32, %c0_i32_0 : i32, i32
  }
  func.func @transform_7(%arg0: i32) -> (i32, i32) {
    %c0_i32 = arith.constant 0 : i32
    %c0_i32_0 = arith.constant 0 : i32
    return %arg0, %c0_i32 : i32, i32
  }
  func.func @transform_8(%arg0: i32) -> (i32, i32) {
    %c0_i32 = arith.constant 0 : i32
    %c0_i32_0 = arith.constant 0 : i32
    return %arg0, %c0_i32 : i32, i32
  }
  func.func @transform_9(%arg0: i32) -> (i32, i32) {
    %c0_i32 = arith.constant 0 : i32
    %c0_i32_0 = arith.constant 0 : i32
    return %arg0, %c0_i32 : i32, i32
  }
  func.func @transform_10(%arg0: i32) -> (i32, i32) {
    %c0_i32 = arith.constant 0 : i32
    %c0_i32_0 = arith.constant 0 : i32
    return %arg0, %c0_i32 : i32, i32
  }
}

</mosaic_0001>

<llo_original>
// kernel: geniepath_layer.1
$region0: #{geniepath_layer.1}
  #allocation0 [shape = 'u32[]', space=smem, size = 0x4, offset = 0x4, fixed_abs, tag = 'smem constant byte address 0x4 - core index']
  #allocation1 [shape = 'u32[72,128]{1,0:T(1,128)}', space=vmem, size = 0x9000, scoped, tag = 'internal scratch']
  %s0 = inlined_call_operand.vmem [shape: bf16[16,256], index: 0, kind: input, shape index: {}]
  %s1 = inlined_call_operand.vmem [shape: f32[16,1], index: 1, kind: input, shape index: {}]
  %s2 = inlined_call_operand.vmem [shape: f32[1,16], index: 2, kind: input, shape index: {}]
  %s3 = inlined_call_operand.vmem [shape: bf16[16,16], index: 3, kind: input, shape index: {}]
  %s4 = inlined_call_operand.vmem [shape: f32[1,256], index: 4, kind: input, shape index: {}]
  %s5 = inlined_call_operand.vmem [shape: bf16[256,1024], index: 5, kind: input, shape index: {}]
  %s6 = inlined_call_operand.vmem [shape: bf16[256,1024], index: 6, kind: input, shape index: {}]
  %s7 = inlined_call_operand.vmem [shape: f32[16,256], index: 7, kind: input, shape index: {}, may-alias: {7,9}]
  %s8 = inlined_call_operand.vmem [shape: f32[16,256], index: 8, kind: input, shape index: {}, may-alias: {8,10}]
  %s9 = inlined_call_operand.vmem [shape: f32[16,256], index: 9, kind: output, shape index: {0}, may-alias: {7,9}]
  %s10 = inlined_call_operand.vmem [shape: f32[16,256], index: 10, kind: output, shape index: {1}, may-alias: {8,10}]
  %11 = xla_tuple %s9, %s10
  %s12 = sld [smem:[#allocation0]]
  $region77: #{geniepath_layer.1} parent=0
    _
  %s14 = ssub.s32 1, %s12
  %s15 = scalar_select 0, %s14, %s12
  loop: start=0, step=1, limit=4
  $region2: #{geniepath_layer.1} parent=0 // loop_pre_header
    _
  $region3: #{geniepath_layer.1} parent=0 // loop_header
    %s17 = sphi 0, %s21
    %p18 = scmp.ge.s32.totalorder %s17, 4
    %s25 = sphi 0, %s25
    %s27 = sphi 0, %s25
    %s28 = sphi 0, %s27
    %s42 = sphi 0, %s28
    %s48 = sphi 0, %s50
    %s51 = sphi 0, %s48
    %s52 = sphi 0, %s51
    %s68 = sphi 0, %s52
    %s72 = sphi 0, %s72
    %s74 = sphi 0, %s72
    %s75 = sphi 0, %s74
    %s89 = sphi 0, %s75
    %s95 = sphi 0, %s97
    %s98 = sphi 0, %s95
    %s99 = sphi 0, %s98
    %s115 = sphi 0, %s99
    %s119 = sphi 0, %s119
    %s121 = sphi 0, %s119
    %s122 = sphi 0, %s121
    %s136 = sphi 0, %s122
    %s140 = sphi 0, %s140
    %s142 = sphi 0, %s140
    %s143 = sphi 0, %s142
    %s157 = sphi 0, %s143
    %s161 = sphi 0, %s161
    %s163 = sphi 0, %s161
    %s164 = sphi 0, %s163
    %s178 = sphi 0, %s164
    %s184 = sphi 0, %s186
    %s187 = sphi 0, %s184
    %s188 = sphi 0, %s187
    %s204 = sphi 0, %s188
    %s210 = sphi 0, %s212
    %s213 = sphi 0, %s210
    %s214 = sphi 0, %s213
    %s230 = sphi 0, %s214
    %s236 = sphi 0, %s238
    %s239 = sphi 0, %s236
    %s240 = sphi 0, %s239
    %s256 = sphi 0, %s240
    %s262 = sphi 0, %s264
    %s265 = sphi 0, %s262
    %s266 = sphi 0, %s265
    %s282 = sphi 0, %s266
  $region4: #{geniepath_layer.1} parent=0 // loop_header_branch
    %20 = sbr.rel (%p18) target = $region8
  $region5: #{geniepath_layer.1} parent=0 // loop_body
    %s22 = ssub.s32 %s17, 1
    %s23 = ssub.s32 %s17, 2
    %s24 = sadd.s32 %s17, 1
    %s26 = sadd.s32 %s25, 1
    %p29 = scmp.eq.s32.totalorder %s17, 1
    %p30 = scmp.ne.s32.totalorder %s25, %s27
    %p31 = scmp.eq.s32.totalorder %s17, 0
    %p32 = por %p30, %p31
    %p33 = scmp.ne.s32.totalorder %s25, %s27
    %p34 = scmp.eq.s32.totalorder %s22, 1
    %p35 = por %p33, %p34
    %p36 = scmp.ne.s32.totalorder %s27, %s28
    %p37 = scmp.eq.s32.totalorder %s22, 0
    %p38 = por %p36, %p37
    %p39 = scmp.ne.s32.totalorder %s27, %s28
    %p40 = scmp.eq.s32.totalorder %s23, 1
    %p41 = por %p39, %p40
    %p43 = scmp.ne.s32.totalorder %s28, %s42
    %p44 = scmp.eq.s32.totalorder %s23, 0
    %p45 = por %p43, %p44
    %s46 = ssub.s32 %s17, %s24
    %p47 = scmp.eq.s32.totalorder %s46, 0
    %s49 = sadd.s32 %s48, 1
    %s50 = scalar_select %p47, %s48, %s49
    %p53 = pneg %p47
    %p54 = scmp.eq.s32.totalorder %s17, 1
    %p55 = por %p53, %p54
    %p56 = scmp.ne.s32.totalorder %s48, %s51
    %p57 = scmp.eq.s32.totalorder %s17, 0
    %p58 = por %p56, %p57
    %p59 = scmp.ne.s32.totalorder %s48, %s51
    %p60 = scmp.eq.s32.totalorder %s22, 1
    %p61 = por %p59, %p60
    %p62 = scmp.ne.s32.totalorder %s51, %s52
    %p63 = scmp.eq.s32.totalorder %s22, 0
    %p64 = por %p62, %p63
    %p65 = scmp.ne.s32.totalorder %s51, %s52
    %p66 = scmp.eq.s32.totalorder %s23, 1
    %p67 = por %p65, %p66
    %p69 = scmp.ne.s32.totalorder %s52, %s68
    %p70 = scmp.eq.s32.totalorder %s23, 0
    %p71 = por %p69, %p70
    %s73 = sadd.s32 %s72, 1
    %p76 = scmp.eq.s32.totalorder %s17, 1
    %p77 = scmp.ne.s32.totalorder %s72, %s74
    %p78 = scmp.eq.s32.totalorder %s17, 0
    %p79 = por %p77, %p78
    %p80 = scmp.ne.s32.totalorder %s72, %s74
    %p81 = scmp.eq.s32.totalorder %s22, 1
    %p82 = por %p80, %p81
    %p83 = scmp.ne.s32.totalorder %s74, %s75
    %p84 = scmp.eq.s32.totalorder %s22, 0
    %p85 = por %p83, %p84
    %p86 = scmp.ne.s32.totalorder %s74, %s75
    %p87 = scmp.eq.s32.totalorder %s23, 1
    %p88 = por %p86, %p87
    %p90 = scmp.ne.s32.totalorder %s75, %s89
    %p91 = scmp.eq.s32.totalorder %s23, 0
    %p92 = por %p90, %p91
    %s93 = ssub.s32 %s17, %s24
    %p94 = scmp.eq.s32.totalorder %s93, 0
    %s96 = sadd.s32 %s95, 1
    %s97 = scalar_select %p94, %s95, %s96
    %p100 = pneg %p94
    %p101 = scmp.eq.s32.totalorder %s17, 1
    %p102 = por %p100, %p101
    %p103 = scmp.ne.s32.totalorder %s95, %s98
    %p104 = scmp.eq.s32.totalorder %s17, 0
    %p105 = por %p103, %p104
    %p106 = scmp.ne.s32.totalorder %s95, %s98
    %p107 = scmp.eq.s32.totalorder %s22, 1
    %p108 = por %p106, %p107
    %p109 = scmp.ne.s32.totalorder %s98, %s99
    %p110 = scmp.eq.s32.totalorder %s22, 0
    %p111 = por %p109, %p110
    %p112 = scmp.ne.s32.totalorder %s98, %s99
    %p113 = scmp.eq.s32.totalorder %s23, 1
    %p114 = por %p112, %p113
    %p116 = scmp.ne.s32.totalorder %s99, %s115
    %p117 = scmp.eq.s32.totalorder %s23, 0
    %p118 = por %p116, %p117
    %s120 = sadd.s32 %s119, 1
    %p123 = scmp.eq.s32.totalorder %s17, 1
    %p124 = scmp.ne.s32.totalorder %s119, %s121
    %p125 = scmp.eq.s32.totalorder %s17, 0
    %p126 = por %p124, %p125
    %p127 = scmp.ne.s32.totalorder %s119, %s121
    %p128 = scmp.eq.s32.totalorder %s22, 1
    %p129 = por %p127, %p128
    %p130 = scmp.ne.s32.totalorder %s121, %s122
    %p131 = scmp.eq.s32.totalorder %s22, 0
    %p132 = por %p130, %p131
    %p133 = scmp.ne.s32.totalorder %s121, %s122
    %p134 = scmp.eq.s32.totalorder %s23, 1
    %p135 = por %p133, %p134
    %p137 = scmp.ne.s32.totalorder %s122, %s136
    %p138 = scmp.eq.s32.totalorder %s23, 0
    %p139 = por %p137, %p138
    %s141 = sadd.s32 %s140, 1
    %p144 = scmp.eq.s32.totalorder %s17, 1
    %p145 = scmp.ne.s32.totalorder %s140, %s142
    %p146 = scmp.eq.s32.totalorder %s17, 0
    %p147 = por %p145, %p146
    %p148 = scmp.ne.s32.totalorder %s140, %s142
    %p149 = scmp.eq.s32.totalorder %s22, 1
    %p150 = por %p148, %p149
    %p151 = scmp.ne.s32.totalorder %s142, %s143
    %p152 = scmp.eq.s32.totalorder %s22, 0
    %p153 = por %p151, %p152
    %p154 = scmp.ne.s32.totalorder %s142, %s143
    %p155 = scmp.eq.s32.totalorder %s23, 1
    %p156 = por %p154, %p155
    %p158 = scmp.ne.s32.totalorder %s143, %s157
    %p159 = scmp.eq.s32.totalorder %s23, 0
    %p160 = por %p158, %p159
    %s162 = sadd.s32 %s161, 1
    %p165 = scmp.eq.s32.totalorder %s17, 1
    %p166 = scmp.ne.s32.totalorder %s161, %s163
    %p167 = scmp.eq.s32.totalorder %s17, 0
    %p168 = por %p166, %p167
    %p169 = scmp.ne.s32.totalorder %s161, %s163
    %p170 = scmp.eq.s32.totalorder %s22, 1
    %p171 = por %p169, %p170
    %p172 = scmp.ne.s32.totalorder %s163, %s164
    %p173 = scmp.eq.s32.totalorder %s22, 0
    %p174 = por %p172, %p173
    %p175 = scmp.ne.s32.totalorder %s163, %s164
    %p176 = scmp.eq.s32.totalorder %s23, 1
    %p177 = por %p175, %p176
    %p179 = scmp.ne.s32.totalorder %s164, %s178
    %p180 = scmp.eq.s32.totalorder %s23, 0
    %p181 = por %p179, %p180
    %s182 = ssub.s32 %s17, %s24
    %p183 = scmp.eq.s32.totalorder %s182, 0
    %s185 = sadd.s32 %s184, 1
    %s186 = scalar_select %p183, %s184, %s185
    %p189 = pneg %p183
    %p190 = scmp.eq.s32.totalorder %s17, 1
    %p191 = por %p189, %p190
    %p192 = scmp.ne.s32.totalorder %s184, %s187
    %p193 = scmp.eq.s32.totalorder %s17, 0
    %p194 = por %p192, %p193
    %p195 = scmp.ne.s32.totalorder %s184, %s187
    %p196 = scmp.eq.s32.totalorder %s22, 1
    %p197 = por %p195, %p196
    %p198 = scmp.ne.s32.totalorder %s187, %s188
    %p199 = scmp.eq.s32.totalorder %s22, 0
    %p200 = por %p198, %p199
    %p201 = scmp.ne.s32.totalorder %s187, %s188
    %p202 = scmp.eq.s32.totalorder %s23, 1
    %p203 = por %p201, %p202
    %p205 = scmp.ne.s32.totalorder %s188, %s204
    %p206 = scmp.eq.s32.totalorder %s23, 0
    %p207 = por %p205, %p206
    %s208 = ssub.s32 %s17, %s24
    %p209 = scmp.eq.s32.totalorder %s208, 0
    %s211 = sadd.s32 %s210, 1
    %s212 = scalar_select %p209, %s210, %s211
    %p215 = pneg %p209
    %p216 = scmp.eq.s32.totalorder %s17, 1
    %p217 = por %p215, %p216
    %p218 = scmp.ne.s32.totalorder %s210, %s213
    %p219 = scmp.eq.s32.totalorder %s17, 0
    %p220 = por %p218, %p219
    %p221 = scmp.ne.s32.totalorder %s210, %s213
    %p222 = scmp.eq.s32.totalorder %s22, 1
    %p223 = por %p221, %p222
    %p224 = scmp.ne.s32.totalorder %s213, %s214
    %p225 = scmp.eq.s32.totalorder %s22, 0
    %p226 = por %p224, %p225
    %p227 = scmp.ne.s32.totalorder %s213, %s214
    %p228 = scmp.eq.s32.totalorder %s23, 1
    %p229 = por %p227, %p228
    %p231 = scmp.ne.s32.totalorder %s214, %s230
    %p232 = scmp.eq.s32.totalorder %s23, 0
    %p233 = por %p231, %p232
    %s234 = ssub.s32 %s17, %s24
    %p235 = scmp.eq.s32.totalorder %s234, 0
    %s237 = sadd.s32 %s236, 1
    %s238 = scalar_select %p235, %s236, %s237
    %p241 = pneg %p235
    %p242 = scmp.eq.s32.totalorder %s17, 1
    %p243 = por %p241, %p242
    %p244 = scmp.ne.s32.totalorder %s236, %s239
    %p245 = scmp.eq.s32.totalorder %s17, 0
    %p246 = por %p244, %p245
    %p247 = scmp.ne.s32.totalorder %s236, %s239
    %p248 = scmp.eq.s32.totalorder %s22, 1
    %p249 = por %p247, %p248
    %p250 = scmp.ne.s32.totalorder %s239, %s240
    %p251 = scmp.eq.s32.totalorder %s22, 0
    %p252 = por %p250, %p251
    %p253 = scmp.ne.s32.totalorder %s239, %s240
    %p254 = scmp.eq.s32.totalorder %s23, 1
    %p255 = por %p253, %p254
    %p257 = scmp.ne.s32.totalorder %s240, %s256
    %p258 = scmp.eq.s32.totalorder %s23, 0
    %p259 = por %p257, %p258
    %s260 = ssub.s32 %s17, %s24
    %p261 = scmp.eq.s32.totalorder %s260, 0
    %s263 = sadd.s32 %s262, 1
    %s264 = scalar_select %p261, %s262, %s263
    %p267 = pneg %p261
    %p268 = scmp.eq.s32.totalorder %s17, 1
    %p269 = por %p267, %p268
    %p270 = scmp.ne.s32.totalorder %s262, %s265
    %p271 = scmp.eq.s32.totalorder %s17, 0
    %p272 = por %p270, %p271
    %p273 = scmp.ne.s32.totalorder %s262, %s265
    %p274 = scmp.eq.s32.totalorder %s22, 1
    %p275 = por %p273, %p274
    %p276 = scmp.ne.s32.totalorder %s265, %s266
    %p277 = scmp.eq.s32.totalorder %s22, 0
    %p278 = por %p276, %p277
    %p279 = scmp.ne.s32.totalorder %s265, %s266
    %p280 = scmp.eq.s32.totalorder %s23, 1
    %p281 = por %p279, %p280
    %p283 = scmp.ne.s32.totalorder %s266, %s282
    %p284 = scmp.eq.s32.totalorder %s23, 0
    %p285 = por %p283, %p284
    %p286 = scmp.le.s32.totalorder 1, %s17
    %p287 = scmp.lt.s32.totalorder %s17, 3
    %p288 = pnand %p286, %p287
    %p289 = pneg %p288
    // Predicated region
    $region9: #{geniepath_layer.1} parent=5 // pred_check
      _
    $region10: #{geniepath_layer.1} parent=5 // pred_check_branch
      %291 = sbr.rel (%p288) target = $region12
    $region11: #{geniepath_layer.1} parent=5 // pred_region
      %s292 = ssub.s32 %s17, 1
      // Predicated region
      $region13: #{geniepath_layer.1} parent=11 // pred_check
        %p293 = pneg %p38
      $region14: #{geniepath_layer.1} parent=11 // pred_check_branch
        %295 = sbr.rel (%p293) target = $region16
      $region15: #{geniepath_layer.1} parent=11 // pred_region
        _
      $region16: #{geniepath_layer.1} parent=11 // pred_fallthru
        _
      // Predicated region
      $region17: #{geniepath_layer.1} parent=11 // pred_check
        %p296 = pneg %p85
      $region18: #{geniepath_layer.1} parent=11 // pred_check_branch
        %298 = sbr.rel (%p296) target = $region20
      $region19: #{geniepath_layer.1} parent=11 // pred_region
        _
      $region20: #{geniepath_layer.1} parent=11 // pred_fallthru
        _
      // Predicated region
      $region21: #{geniepath_layer.1} parent=11 // pred_check
        %p299 = pneg %p132
      $region22: #{geniepath_layer.1} parent=11 // pred_check_branch
        %301 = sbr.rel (%p299) target = $region24
      $region23: #{geniepath_layer.1} parent=11 // pred_region
        _
      $region24: #{geniepath_layer.1} parent=11 // pred_fallthru
        _
      // Predicated region
      $region25: #{geniepath_layer.1} parent=11 // pred_check
        %p302 = pneg %p153
      $region26: #{geniepath_layer.1} parent=11 // pred_check_branch
        %304 = sbr.rel (%p302) target = $region28
      $region27: #{geniepath_layer.1} parent=11 // pred_region
        _
      $region28: #{geniepath_layer.1} parent=11 // pred_fallthru
        _
      // Predicated region
      $region29: #{geniepath_layer.1} parent=11 // pred_check
        %p305 = pneg %p174
      $region30: #{geniepath_layer.1} parent=11 // pred_check_branch
        %307 = sbr.rel (%p305) target = $region32
      $region31: #{geniepath_layer.1} parent=11 // pred_region
        _
      $region32: #{geniepath_layer.1} parent=11 // pred_fallthru
        _
    $region12: #{geniepath_layer.1} parent=5 // pred_fallthru
      _
    %p308 = scmp.lt.s32.totalorder %s17, 2
    // Predicated region
    $region33: #{geniepath_layer.1} parent=5 // pred_check
      %p309 = pneg %p308
    $region34: #{geniepath_layer.1} parent=5 // pred_check_branch
      %311 = sbr.rel (%p309) target = $region36
    $region35: #{geniepath_layer.1} parent=5 // pred_region
      // Predicated region
      $region37: #{geniepath_layer.1} parent=35 // pred_check
        %p312 = pneg %p58
      $region38: #{geniepath_layer.1} parent=35 // pred_check_branch
        %314 = sbr.rel (%p312) target = $region40
      $region39: #{geniepath_layer.1} parent=35 // pred_region
        %p315 = scmp.lt.s32.totalorder %s17, 1
        %s316 = scalar_select %p315, %s17, 1
        %s317 = smul.addr %s316, 8
        %s318 = scalar_lea.vmem %s1, %s317
      $region40: #{geniepath_layer.1} parent=35 // pred_fallthru
        _
      // Predicated region
      $region41: #{geniepath_layer.1} parent=35 // pred_check
        %p319 = pneg %p105
      $region42: #{geniepath_layer.1} parent=35 // pred_check_branch
        %321 = sbr.rel (%p319) target = $region44
      $region43: #{geniepath_layer.1} parent=35 // pred_region
        %p322 = scmp.lt.s32.totalorder %s17, 1
        %s323 = scalar_select %p322, %s17, 1
        %s324 = smul.addr %s323, 4
        %s325 = scalar_lea.vmem %s3, %s324
      $region44: #{geniepath_layer.1} parent=35 // pred_fallthru
        _
      // Predicated region
      $region45: #{geniepath_layer.1} parent=35 // pred_check
        %p326 = pneg %p194
      $region46: #{geniepath_layer.1} parent=35 // pred_check_branch
        %328 = sbr.rel (%p326) target = $region48
      $region47: #{geniepath_layer.1} parent=35 // pred_region
        %p329 = scmp.lt.s32.totalorder %s17, 1
        %s330 = scalar_select %p329, %s17, 1
        %s331 = smul.addr %s330, 2
        %s332 = smul.addr %s331, 8
        %s333 = scalar_lea.vmem %s7, %s332
      $region48: #{geniepath_layer.1} parent=35 // pred_fallthru
        _
      // Predicated region
      $region49: #{geniepath_layer.1} parent=35 // pred_check
        %p334 = pneg %p220
      $region50: #{geniepath_layer.1} parent=35 // pred_check_branch
        %336 = sbr.rel (%p334) target = $region52
      $region51: #{geniepath_layer.1} parent=35 // pred_region
        %p337 = scmp.lt.s32.totalorder %s17, 1
        %s338 = scalar_select %p337, %s17, 1
        %s339 = smul.addr %s338, 2
        %s340 = smul.addr %s339, 8
        %s341 = scalar_lea.vmem %s8, %s340
      $region52: #{geniepath_layer.1} parent=35 // pred_fallthru
        _
    $region36: #{geniepath_layer.1} parent=5 // pred_fallthru
      _
    %p342 = scmp.le.s32.totalorder 1, %s17
    %p343 = scmp.lt.s32.totalorder %s17, 3
    %p344 = pnand %p342, %p343
    %p345 = pneg %p344
    // Predicated region
    $region53: #{geniepath_layer.1} parent=5 // pred_check
      _
    $region54: #{geniepath_layer.1} parent=5 // pred_check_branch
      %347 = sbr.rel (%p344) target = $region56
    $region55: #{geniepath_layer.1} parent=5 // pred_region
      %s348 = ssub.s32 %s17, 1
      %p349 = pneg %p38
      %p350 = pneg %p35
      %p351 = scmp.lt.s32.totalorder %s22, 1
      %s352 = scalar_select %p351, %s22, 1
      %s353 = smul.addr %s352, 8
      %s354 = scalar_lea.vmem %s1, %s353
      %p355 = pneg %p64
      %p356 = pneg %p61
      %p357 = pneg %p85
      %p358 = pneg %p82
      %p359 = scmp.lt.s32.totalorder %s22, 1
      %s360 = scalar_select %p359, %s22, 1
      %s361 = smul.addr %s360, 4
      %s362 = scalar_lea.vmem %s3, %s361
      %p363 = pneg %p111
      %p364 = pneg %p108
      %p365 = pneg %p132
      %p366 = pneg %p129
      %p367 = pneg %p153
      %p368 = pneg %p150
      %p369 = pneg %p174
      %p370 = pneg %p171
      %p371 = scmp.lt.s32.totalorder %s22, 1
      %s372 = scalar_select %p371, %s22, 1
      %s373 = smul.addr %s372, 2
      %s374 = smul.addr %s373, 8
      %s375 = scalar_lea.vmem %s7, %s374
      %p376 = pneg %p200
      %p377 = pneg %p197
      %p378 = scmp.lt.s32.totalorder %s22, 1
      %s379 = scalar_select %p378, %s22, 1
      %s380 = smul.addr %s379, 2
      %s381 = smul.addr %s380, 8
      %s382 = scalar_lea.vmem %s8, %s381
      %p383 = pneg %p226
      %p384 = pneg %p223
      %p385 = pneg %p252
      %p386 = pneg %p249
      %p387 = scmp.lt.s32.totalorder %s22, 1
      %s388 = scalar_select %p387, %s22, 1
      %s389 = smul.addr %s388, 2
      %s390 = smul.addr %s389, 8
      %s391 = scalar_lea.vmem %s9, %s390
      %p392 = pneg %p278
      %p393 = pneg %p275
      %p394 = scmp.lt.s32.totalorder %s22, 1
      %s395 = scalar_select %p394, %s22, 1
      %s396 = smul.addr %s395, 2
      %s397 = smul.addr %s396, 8
      %s398 = scalar_lea.vmem %s10, %s397
      %p399 = scmp.lt.s32.totalorder %s22, 1
      %s400 = scalar_select %p399, %s22, 1
      %s401 = smul.addr %s400, 8
      %s402 = scalar_lea.vmem %s1, %s401
      %p403 = scmp.lt.s32.totalorder %s22, 1
      %s404 = scalar_select %p403, %s22, 1
      %s405 = smul.addr %s404, 4
      %s406 = scalar_lea.vmem %s3, %s405
      %p407 = scmp.lt.s32.totalorder %s22, 1
      %s408 = scalar_select %p407, %s22, 1
      %s409 = smul.addr %s408, 2
      %s410 = smul.addr %s409, 8
      %s411 = scalar_lea.vmem %s7, %s410
      %p412 = scmp.lt.s32.totalorder %s22, 1
      %s413 = scalar_select %p412, %s22, 1
      %s414 = smul.addr %s413, 2
      %s415 = smul.addr %s414, 8
      %s416 = scalar_lea.vmem %s8, %s415
      %p417 = scmp.lt.s32.totalorder %s22, 1
      %s418 = scalar_select %p417, %s22, 1
      %s419 = smul.addr %s418, 2
      %s420 = smul.addr %s419, 8
      %s421 = scalar_lea.vmem %s9, %s420
      %p422 = scmp.lt.s32.totalorder %s22, 1
      %s423 = scalar_select %p422, %s22, 1
      %s424 = smul.addr %s423, 2
      %s425 = smul.addr %s424, 8
      %s426 = scalar_lea.vmem %s10, %s425
      %v428 = vld [vmem:[%s402] sm:$0xff]
      %v429 = vld [vmem:[%s2] sm:$0x1]
      %431 = vset.pattern.permute.xlu0 0
      %432 = vperm.xlu0 %431, %v428
      %v433 = vpop.permute.xlu0 %432
      %v436 = vperm.slane %v429, 0
      %v438 = vadd.f32 %v433, %v436
      %vm439 = vcmp.gt.f32.partialorder %v438, 0.0
      %v440 = vmul.f32 %v438, 0.2
      %v441 = vsel %vm439, %v438, %v440
      %v442 = vld [vmem:[%s406] sm:$0xf]
      %v443 = vunpack.c.l.bf16 %v442
      %v444 = vadd.f32 %v441, %v443
      %vm445 = vcmask 130048
      %v446 = vsel %vm445, %v444, -inf
      %447 = vmax.xlane.f32.xlu0 %v446
      %v448 = vpop.xlane.xlu0 %447
      %v449 = vsub.f32 %v444, %v448
      %v450 = vmul.f32 %v449, 1.442695
      %v451 = vpow.pop %v450
      %v452 = vpack.c.bf16 %v451, %v451
      %v453 = vld [vmem:[%s0] sm:$0xff]
      %v454 = vld [vmem:[%s0 + $0x8] sm:$0xff]
      %v457 = vunpack.c.l.b16 %v453
      %v458 = vunpack.c.h.b16 %v453
      %v459 = vunpack.c.l.b16 %v454
      %v460 = vunpack.c.h.b16 %v454
      %v461 = vpack.c.b16 %v459, %v457
      %v462 = vpack.c.b16 %v460, %v458
      %v466 = vsel %vm445, %v452, 0
      %468 = vmatpush.bf16.msra.mxu0 0
      %469 = vmatpush.bf16.msra.mxu0 0
      %470 = vmatpush.bf16.msra.mxu0 0
      %471 = vmatpush.bf16.msra.mxu0 0
      %472 = vmatpush.bf16.msra.mxu0 0
      %473 = vmatpush.bf16.msra.mxu0 0
      %474 = vmatpush.bf16.msra.mxu0 0
      %475 = vmatpush.bf16.msra.mxu0 %v461
      %476 = vmatmul.bf16.gmra.mxu0 %v466
      %v477 = vpop.f32.mrf.mxu0
      %v478 = vadd.f32 0.0, %v477
      %v479 = vpop.f32.mrf.mxu0
      %480 = vdwg.mxu0
      %481 = vmatpush.bf16.msra.mxu0 0
      %482 = vmatpush.bf16.msra.mxu0 0
      %483 = vmatpush.bf16.msra.mxu0 0
      %484 = vmatpush.bf16.msra.mxu0 0
      %485 = vmatpush.bf16.msra.mxu0 0
      %486 = vmatpush.bf16.msra.mxu0 0
      %487 = vmatpush.bf16.msra.mxu0 0
      %488 = vmatpush.bf16.msra.mxu0 %v462
      %489 = vmatmul.bf16.gmra.mxu0 %v466
      %v490 = vpop.f32.mrf.mxu0
      %v491 = vadd.f32 0.0, %v490
      %v492 = vpop.f32.mrf.mxu0
      %493 = vdwg.mxu0
      %v494 = vsel %vm445, %v451, 0.0
      %495 = vadd.xlane.f32.xlu0 %v494
      %v496 = vpop.xlane.xlu0 %495
      %v497 = vrcp.pop %v496
      %v498 = vmul.f32 %v478, %v497
      %v499 = vmul.f32 %v491, %v497
      %v500 = vld [vmem:[%s4] sm:$0x3]
      %v502 = vperm.slane %v500, 0
      %v503 = vperm.slane %v500, 1
      %v506 = vadd.f32 %v498, %v502
      %v507 = vadd.f32 %v499, %v503
      %v508 = vtanh.pop %v506
      %v509 = vtanh.pop %v507
      %v510 = vpack.c.bf16 %v508, %v508
      %v511 = vpack.c.bf16 %v509, %v509
      %v512 = vld [vmem:[%s411] sm:$0xff]
      %v513 = vld [vmem:[%s411 + $0x8] sm:$0xff]
      %v514 = vpack.c.bf16 %v512, %v512
      %v515 = vpack.c.bf16 %v513, %v513
      %v516 = vld [vmem:[%s5] sm:$0xff]
      %v517 = vld [vmem:[%s5 + $0x8] sm:$0xff]
      %v518 = vld [vmem:[%s5 + $0x10] sm:$0xff]
      %v519 = vld [vmem:[%s5 + $0x18] sm:$0xff]
      %v520 = vld [vmem:[%s5 + $0x20] sm:$0xff]
      %v521 = vld [vmem:[%s5 + $0x28] sm:$0xff]
      %v522 = vld [vmem:[%s5 + $0x30] sm:$0xff]
      %v523 = vld [vmem:[%s5 + $0x38] sm:$0xff]
      %v524 = vld [vmem:[%s5 + $0x40] sm:$0xff]
      %v525 = vld [vmem:[%s5 + $0x48] sm:$0xff]
      %v526 = vld [vmem:[%s5 + $0x50] sm:$0xff]
      %v527 = vld [vmem:[%s5 + $0x58] sm:$0xff]
      %v528 = vld [vmem:[%s5 + $0x60] sm:$0xff]
      %v529 = vld [vmem:[%s5 + $0x68] sm:$0xff]
      %v530 = vld [vmem:[%s5 + $0x70] sm:$0xff]
      %v531 = vld [vmem:[%s5 + $0x78] sm:$0xff]
      %v532 = vld [vmem:[%s5 + $0x80] sm:$0xff]
      %v533 = vld [vmem:[%s5 + $0x88] sm:$0xff]
      %v534 = vld [vmem:[%s5 + $0x90] sm:$0xff]
      %v535 = vld [vmem:[%s5 + $0x98] sm:$0xff]
      %v536 = vld [vmem:[%s5 + $0xa0] sm:$0xff]
      %v537 = vld [vmem:[%s5 + $0xa8] sm:$0xff]
      %v538 = vld [vmem:[%s5 + $0xb0] sm:$0xff]
      %v539 = vld [vmem:[%s5 + $0xb8] sm:$0xff]
      %v540 = vld [vmem:[%s5 + $0xc0] sm:$0xff]
      %v541 = vld [vmem:[%s5 + $0xc8] sm:$0xff]
      %v542 = vld [vmem:[%s5 + $0xd0] sm:$0xff]
      %v543 = vld [vmem:[%s5 + $0xd8] sm:$0xff]
      %v544 = vld [vmem:[%s5 + $0xe0] sm:$0xff]
      %v545 = vld [vmem:[%s5 + $0xe8] sm:$0xff]
      %v546 = vld [vmem:[%s5 + $0xf0] sm:$0xff]
      %v547 = vld [vmem:[%s5 + $0xf8] sm:$0xff]
      %v548 = vld [vmem:[%s5 + $0x100] sm:$0xff]
      %v549 = vld [vmem:[%s5 + $0x108] sm:$0xff]
      %v550 = vld [vmem:[%s5 + $0x110] sm:$0xff]
      %v551 = vld [vmem:[%s5 + $0x118] sm:$0xff]
      %v552 = vld [vmem:[%s5 + $0x120] sm:$0xff]
      %v553 = vld [vmem:[%s5 + $0x128] sm:$0xff]
      %v554 = vld [vmem:[%s5 + $0x130] sm:$0xff]
      %v555 = vld [vmem:[%s5 + $0x138] sm:$0xff]
      %v556 = vld [vmem:[%s5 + $0x140] sm:$0xff]
      %v557 = vld [vmem:[%s5 + $0x148] sm:$0xff]
      %v558 = vld [vmem:[%s5 + $0x150] sm:$0xff]
      %v559 = vld [vmem:[%s5 + $0x158] sm:$0xff]
      %v560 = vld [vmem:[%s5 + $0x160] sm:$0xff]
      %v561 = vld [vmem:[%s5 + $0x168] sm:$0xff]
      %v562 = vld [vmem:[%s5 + $0x170] sm:$0xff]
      %v563 = vld [vmem:[%s5 + $0x178] sm:$0xff]
      %v564 = vld [vmem:[%s5 + $0x180] sm:$0xff]
      %v565 = vld [vmem:[%s5 + $0x188] sm:$0xff]
      %v566 = vld [vmem:[%s5 + $0x190] sm:$0xff]
      %v567 = vld [vmem:[%s5 + $0x198] sm:$0xff]
      %v568 = vld [vmem:[%s5 + $0x1a0] sm:$0xff]
      %v569 = vld [vmem:[%s5 + $0x1a8] sm:$0xff]
      %v570 = vld [vmem:[%s5 + $0x1b0] sm:$0xff]
      %v571 = vld [vmem:[%s5 + $0x1b8] sm:$0xff]
      %v572 = vld [vmem:[%s5 + $0x1c0] sm:$0xff]
      %v573 = vld [vmem:[%s5 + $0x1c8] sm:$0xff]
      %v574 = vld [vmem:[%s5 + $0x1d0] sm:$0xff]
      %v575 = vld [vmem:[%s5 + $0x1d8] sm:$0xff]
      %v576 = vld [vmem:[%s5 + $0x1e0] sm:$0xff]
      %v577 = vld [vmem:[%s5 + $0x1e8] sm:$0xff]
      %v578 = vld [vmem:[%s5 + $0x1f0] sm:$0xff]
      %v579 = vld [vmem:[%s5 + $0x1f8] sm:$0xff]
      %v580 = vld [vmem:[%s5 + $0x200] sm:$0xff]
      %v581 = vld [vmem:[%s5 + $0x208] sm:$0xff]
      %v582 = vld [vmem:[%s5 + $0x210] sm:$0xff]
      %v583 = vld [vmem:[%s5 + $0x218] sm:$0xff]
      %v584 = vld [vmem:[%s5 + $0x220] sm:$0xff]
      %v585 = vld [vmem:[%s5 + $0x228] sm:$0xff]
      %v586 = vld [vmem:[%s5 + $0x230] sm:$0xff]
      %v587 = vld [vmem:[%s5 + $0x238] sm:$0xff]
      %v588 = vld [vmem:[%s5 + $0x240] sm:$0xff]
      %v589 = vld [vmem:[%s5 + $0x248] sm:$0xff]
      %v590 = vld [vmem:[%s5 + $0x250] sm:$0xff]
      %v591 = vld [vmem:[%s5 + $0x258] sm:$0xff]
      %v592 = vld [vmem:[%s5 + $0x260] sm:$0xff]
      %v593 = vld [vmem:[%s5 + $0x268] sm:$0xff]
      %v594 = vld [vmem:[%s5 + $0x270] sm:$0xff]
      %v595 = vld [vmem:[%s5 + $0x278] sm:$0xff]
      %v596 = vld [vmem:[%s5 + $0x280] sm:$0xff]
      %v597 = vld [vmem:[%s5 + $0x288] sm:$0xff]
      %v598 = vld [vmem:[%s5 + $0x290] sm:$0xff]
      %v599 = vld [vmem:[%s5 + $0x298] sm:$0xff]
      %v600 = vld [vmem:[%s5 + $0x2a0] sm:$0xff]
      %v601 = vld [vmem:[%s5 + $0x2a8] sm:$0xff]
      %v602 = vld [vmem:[%s5 + $0x2b0] sm:$0xff]
      %v603 = vld [vmem:[%s5 + $0x2b8] sm:$0xff]
      %v604 = vld [vmem:[%s5 + $0x2c0] sm:$0xff]
      %v605 = vld [vmem:[%s5 + $0x2c8] sm:$0xff]
      %v606 = vld [vmem:[%s5 + $0x2d0] sm:$0xff]
      %v607 = vld [vmem:[%s5 + $0x2d8] sm:$0xff]
      %v608 = vld [vmem:[%s5 + $0x2e0] sm:$0xff]
      %v609 = vld [vmem:[%s5 + $0x2e8] sm:$0xff]
      %v610 = vld [vmem:[%s5 + $0x2f0] sm:$0xff]
      %v611 = vld [vmem:[%s5 + $0x2f8] sm:$0xff]
      %v612 = vld [vmem:[%s5 + $0x300] sm:$0xff]
      %v613 = vld [vmem:[%s5 + $0x308] sm:$0xff]
      %v614 = vld [vmem:[%s5 + $0x310] sm:$0xff]
      %v615 = vld [vmem:[%s5 + $0x318] sm:$0xff]
      %v616 = vld [vmem:[%s5 + $0x320] sm:$0xff]
      %v617 = vld [vmem:[%s5 + $0x328] sm:$0xff]
      %v618 = vld [vmem:[%s5 + $0x330] sm:$0xff]
      %v619 = vld [vmem:[%s5 + $0x338] sm:$0xff]
      %v620 = vld [vmem:[%s5 + $0x340] sm:$0xff]
      %v621 = vld [vmem:[%s5 + $0x348] sm:$0xff]
      %v622 = vld [vmem:[%s5 + $0x350] sm:$0xff]
      %v623 = vld [vmem:[%s5 + $0x358] sm:$0xff]
      %v624 = vld [vmem:[%s5 + $0x360] sm:$0xff]
      %v625 = vld [vmem:[%s5 + $0x368] sm:$0xff]
      %v626 = vld [vmem:[%s5 + $0x370] sm:$0xff]
      %v627 = vld [vmem:[%s5 + $0x378] sm:$0xff]
      %v628 = vld [vmem:[%s5 + $0x380] sm:$0xff]
      %v629 = vld [vmem:[%s5 + $0x388] sm:$0xff]
      %v630 = vld [vmem:[%s5 + $0x390] sm:$0xff]
      %v631 = vld [vmem:[%s5 + $0x398] sm:$0xff]
      %v632 = vld [vmem:[%s5 + $0x3a0] sm:$0xff]
      %v633 = vld [vmem:[%s5 + $0x3a8] sm:$0xff]
      %v634 = vld [vmem:[%s5 + $0x3b0] sm:$0xff]
      %v635 = vld [vmem:[%s5 + $0x3b8] sm:$0xff]
      %v636 = vld [vmem:[%s5 + $0x3c0] sm:$0xff]
      %v637 = vld [vmem:[%s5 + $0x3c8] sm:$0xff]
      %v638 = vld [vmem:[%s5 + $0x3d0] sm:$0xff]
      %v639 = vld [vmem:[%s5 + $0x3d8] sm:$0xff]
      %v640 = vld [vmem:[%s5 + $0x3e0] sm:$0xff]
      %v641 = vld [vmem:[%s5 + $0x3e8] sm:$0xff]
      %v642 = vld [vmem:[%s5 + $0x3f0] sm:$0xff]
      %v643 = vld [vmem:[%s5 + $0x3f8] sm:$0xff]
      %v644 = vld [vmem:[%s6] sm:$0xff]
      %v645 = vld [vmem:[%s6 + $0x8] sm:$0xff]
      %v646 = vld [vmem:[%s6 + $0x10] sm:$0xff]
      %v647 = vld [vmem:[%s6 + $0x18] sm:$0xff]
      %v648 = vld [vmem:[%s6 + $0x20] sm:$0xff]
      %v649 = vld [vmem:[%s6 + $0x28] sm:$0xff]
      %v650 = vld [vmem:[%s6 + $0x30] sm:$0xff]
      %v651 = vld [vmem:[%s6 + $0x38] sm:$0xff]
      %v652 = vld [vmem:[%s6 + $0x40] sm:$0xff]
      %v653 = vld [vmem:[%s6 + $0x48] sm:$0xff]
      %v654 = vld [vmem:[%s6 + $0x50] sm:$0xff]
      %v655 = vld [vmem:[%s6 + $0x58] sm:$0xff]
      %v656 = vld [vmem:[%s6 + $0x60] sm:$0xff]
      %v657 = vld [vmem:[%s6 + $0x68] sm:$0xff]
      %v658 = vld [vmem:[%s6 + $0x70] sm:$0xff]
      %v659 = vld [vmem:[%s6 + $0x78] sm:$0xff]
      %v660 = vld [vmem:[%s6 + $0x80] sm:$0xff]
      %v661 = vld [vmem:[%s6 + $0x88] sm:$0xff]
      %v662 = vld [vmem:[%s6 + $0x90] sm:$0xff]
      %v663 = vld [vmem:[%s6 + $0x98] sm:$0xff]
      %v664 = vld [vmem:[%s6 + $0xa0] sm:$0xff]
      %v665 = vld [vmem:[%s6 + $0xa8] sm:$0xff]
      %v666 = vld [vmem:[%s6 + $0xb0] sm:$0xff]
      %v667 = vld [vmem:[%s6 + $0xb8] sm:$0xff]
      %v668 = vld [vmem:[%s6 + $0xc0] sm:$0xff]
      %v669 = vld [vmem:[%s6 + $0xc8] sm:$0xff]
      %v670 = vld [vmem:[%s6 + $0xd0] sm:$0xff]
      %v671 = vld [vmem:[%s6 + $0xd8] sm:$0xff]
      %v672 = vld [vmem:[%s6 + $0xe0] sm:$0xff]
      %v673 = vld [vmem:[%s6 + $0xe8] sm:$0xff]
      %v674 = vld [vmem:[%s6 + $0xf0] sm:$0xff]
      %v675 = vld [vmem:[%s6 + $0xf8] sm:$0xff]
      %v676 = vld [vmem:[%s6 + $0x100] sm:$0xff]
      %v677 = vld [vmem:[%s6 + $0x108] sm:$0xff]
      %v678 = vld [vmem:[%s6 + $0x110] sm:$0xff]
      %v679 = vld [vmem:[%s6 + $0x118] sm:$0xff]
      %v680 = vld [vmem:[%s6 + $0x120] sm:$0xff]
      %v681 = vld [vmem:[%s6 + $0x128] sm:$0xff]
      %v682 = vld [vmem:[%s6 + $0x130] sm:$0xff]
      %v683 = vld [vmem:[%s6 + $0x138] sm:$0xff]
      %v684 = vld [vmem:[%s6 + $0x140] sm:$0xff]
      %v685 = vld [vmem:[%s6 + $0x148] sm:$0xff]
      %v686 = vld [vmem:[%s6 + $0x150] sm:$0xff]
      %v687 = vld [vmem:[%s6 + $0x158] sm:$0xff]
      %v688 = vld [vmem:[%s6 + $0x160] sm:$0xff]
      %v689 = vld [vmem:[%s6 + $0x168] sm:$0xff]
      %v690 = vld [vmem:[%s6 + $0x170] sm:$0xff]
      %v691 = vld [vmem:[%s6 + $0x178] sm:$0xff]
      %v692 = vld [vmem:[%s6 + $0x180] sm:$0xff]
      %v693 = vld [vmem:[%s6 + $0x188] sm:$0xff]
      %v694 = vld [vmem:[%s6 + $0x190] sm:$0xff]
      %v695 = vld [vmem:[%s6 + $0x198] sm:$0xff]
      %v696 = vld [vmem:[%s6 + $0x1a0] sm:$0xff]
      %v697 = vld [vmem:[%s6 + $0x1a8] sm:$0xff]
      %v698 = vld [vmem:[%s6 + $0x1b0] sm:$0xff]
      %v699 = vld [vmem:[%s6 + $0x1b8] sm:$0xff]
      %v700 = vld [vmem:[%s6 + $0x1c0] sm:$0xff]
      %v701 = vld [vmem:[%s6 + $0x1c8] sm:$0xff]
      %v702 = vld [vmem:[%s6 + $0x1d0] sm:$0xff]
      %v703 = vld [vmem:[%s6 + $0x1d8] sm:$0xff]
      %v704 = vld [vmem:[%s6 + $0x1e0] sm:$0xff]
      %v705 = vld [vmem:[%s6 + $0x1e8] sm:$0xff]
      %v706 = vld [vmem:[%s6 + $0x1f0] sm:$0xff]
      %v707 = vld [vmem:[%s6 + $0x1f8] sm:$0xff]
      %v708 = vld [vmem:[%s6 + $0x200] sm:$0xff]
      %v709 = vld [vmem:[%s6 + $0x208] sm:$0xff]
      %v710 = vld [vmem:[%s6 + $0x210] sm:$0xff]
      %v711 = vld [vmem:[%s6 + $0x218] sm:$0xff]
      %v712 = vld [vmem:[%s6 + $0x220] sm:$0xff]
      %v713 = vld [vmem:[%s6 + $0x228] sm:$0xff]
      %v714 = vld [vmem:[%s6 + $0x230] sm:$0xff]
      %v715 = vld [vmem:[%s6 + $0x238] sm:$0xff]
      %v716 = vld [vmem:[%s6 + $0x240] sm:$0xff]
      %v717 = vld [vmem:[%s6 + $0x248] sm:$0xff]
      %v718 = vld [vmem:[%s6 + $0x250] sm:$0xff]
      %v719 = vld [vmem:[%s6 + $0x258] sm:$0xff]
      %v720 = vld [vmem:[%s6 + $0x260] sm:$0xff]
      %v721 = vld [vmem:[%s6 + $0x268] sm:$0xff]
      %v722 = vld [vmem:[%s6 + $0x270] sm:$0xff]
      %v723 = vld [vmem:[%s6 + $0x278] sm:$0xff]
      %v724 = vld [vmem:[%s6 + $0x280] sm:$0xff]
      %v725 = vld [vmem:[%s6 + $0x288] sm:$0xff]
      %v726 = vld [vmem:[%s6 + $0x290] sm:$0xff]
      %v727 = vld [vmem:[%s6 + $0x298] sm:$0xff]
      %v728 = vld [vmem:[%s6 + $0x2a0] sm:$0xff]
      %v729 = vld [vmem:[%s6 + $0x2a8] sm:$0xff]
      %v730 = vld [vmem:[%s6 + $0x2b0] sm:$0xff]
      %v731 = vld [vmem:[%s6 + $0x2b8] sm:$0xff]
      %v732 = vld [vmem:[%s6 + $0x2c0] sm:$0xff]
      %v733 = vld [vmem:[%s6 + $0x2c8] sm:$0xff]
      %v734 = vld [vmem:[%s6 + $0x2d0] sm:$0xff]
      %v735 = vld [vmem:[%s6 + $0x2d8] sm:$0xff]
      %v736 = vld [vmem:[%s6 + $0x2e0] sm:$0xff]
      %v737 = vld [vmem:[%s6 + $0x2e8] sm:$0xff]
      %v738 = vld [vmem:[%s6 + $0x2f0] sm:$0xff]
      %v739 = vld [vmem:[%s6 + $0x2f8] sm:$0xff]
      %v740 = vld [vmem:[%s6 + $0x300] sm:$0xff]
      %v741 = vld [vmem:[%s6 + $0x308] sm:$0xff]
      %v742 = vld [vmem:[%s6 + $0x310] sm:$0xff]
      %v743 = vld [vmem:[%s6 + $0x318] sm:$0xff]
      %v744 = vld [vmem:[%s6 + $0x320] sm:$0xff]
      %v745 = vld [vmem:[%s6 + $0x328] sm:$0xff]
      %v746 = vld [vmem:[%s6 + $0x330] sm:$0xff]
      %v747 = vld [vmem:[%s6 + $0x338] sm:$0xff]
      %v748 = vld [vmem:[%s6 + $0x340] sm:$0xff]
      %v749 = vld [vmem:[%s6 + $0x348] sm:$0xff]
      %v750 = vld [vmem:[%s6 + $0x350] sm:$0xff]
      %v751 = vld [vmem:[%s6 + $0x358] sm:$0xff]
      %v752 = vld [vmem:[%s6 + $0x360] sm:$0xff]
      %v753 = vld [vmem:[%s6 + $0x368] sm:$0xff]
      %v754 = vld [vmem:[%s6 + $0x370] sm:$0xff]
      %v755 = vld [vmem:[%s6 + $0x378] sm:$0xff]
      %v756 = vld [vmem:[%s6 + $0x380] sm:$0xff]
      %v757 = vld [vmem:[%s6 + $0x388] sm:$0xff]
      %v758 = vld [vmem:[%s6 + $0x390] sm:$0xff]
      %v759 = vld [vmem:[%s6 + $0x398] sm:$0xff]
      %v760 = vld [vmem:[%s6 + $0x3a0] sm:$0xff]
      %v761 = vld [vmem:[%s6 + $0x3a8] sm:$0xff]
      %v762 = vld [vmem:[%s6 + $0x3b0] sm:$0xff]
      %v763 = vld [vmem:[%s6 + $0x3b8] sm:$0xff]
      %v764 = vld [vmem:[%s6 + $0x3c0] sm:$0xff]
      %v765 = vld [vmem:[%s6 + $0x3c8] sm:$0xff]
      %v766 = vld [vmem:[%s6 + $0x3d0] sm:$0xff]
      %v767 = vld [vmem:[%s6 + $0x3d8] sm:$0xff]
      %v768 = vld [vmem:[%s6 + $0x3e0] sm:$0xff]
      %v769 = vld [vmem:[%s6 + $0x3e8] sm:$0xff]
      %v770 = vld [vmem:[%s6 + $0x3f0] sm:$0xff]
      %v771 = vld [vmem:[%s6 + $0x3f8] sm:$0xff]
      %v900 = vunpack.c.l.b16 %v644
      %v901 = vunpack.c.h.b16 %v644
      %v902 = vunpack.c.l.b16 %v645
      %v903 = vunpack.c.h.b16 %v645
      %v904 = vunpack.c.l.b16 %v646
      %v905 = vunpack.c.h.b16 %v646
      %v906 = vunpack.c.l.b16 %v647
      %v907 = vunpack.c.h.b16 %v647
      %v908 = vunpack.c.l.b16 %v648
      %v909 = vunpack.c.h.b16 %v648
      %v910 = vunpack.c.l.b16 %v649
      %v911 = vunpack.c.h.b16 %v649
      %v912 = vunpack.c.l.b16 %v650
      %v913 = vunpack.c.h.b16 %v650
      %v914 = vunpack.c.l.b16 %v651
      %v915 = vunpack.c.h.b16 %v651
      %v916 = vunpack.c.l.b16 %v652
      %v917 = vunpack.c.h.b16 %v652
      %v918 = vunpack.c.l.b16 %v653
      %v919 = vunpack.c.h.b16 %v653
      %v920 = vunpack.c.l.b16 %v654
      %v921 = vunpack.c.h.b16 %v654
      %v922 = vunpack.c.l.b16 %v655
      %v923 = vunpack.c.h.b16 %v655
      %v924 = vunpack.c.l.b16 %v656
      %v925 = vunpack.c.h.b16 %v656
      %v926 = vunpack.c.l.b16 %v657
      %v927 = vunpack.c.h.b16 %v657
      %v928 = vunpack.c.l.b16 %v658
      %v929 = vunpack.c.h.b16 %v658
      %v930 = vunpack.c.l.b16 %v659
      %v931 = vunpack.c.h.b16 %v659
      %v932 = vunpack.c.l.b16 %v660
      %v933 = vunpack.c.h.b16 %v660
      %v934 = vunpack.c.l.b16 %v661
      %v935 = vunpack.c.h.b16 %v661
      %v936 = vunpack.c.l.b16 %v662
      %v937 = vunpack.c.h.b16 %v662
      %v938 = vunpack.c.l.b16 %v663
      %v939 = vunpack.c.h.b16 %v663
      %v940 = vunpack.c.l.b16 %v664
      %v941 = vunpack.c.h.b16 %v664
      %v942 = vunpack.c.l.b16 %v665
      %v943 = vunpack.c.h.b16 %v665
      %v944 = vunpack.c.l.b16 %v666
      %v945 = vunpack.c.h.b16 %v666
      %v946 = vunpack.c.l.b16 %v667
      %v947 = vunpack.c.h.b16 %v667
      %v948 = vunpack.c.l.b16 %v668
      %v949 = vunpack.c.h.b16 %v668
      %v950 = vunpack.c.l.b16 %v669
      %v951 = vunpack.c.h.b16 %v669
      %v952 = vunpack.c.l.b16 %v670
      %v953 = vunpack.c.h.b16 %v670
      %v954 = vunpack.c.l.b16 %v671
      %v955 = vunpack.c.h.b16 %v671
      %v956 = vunpack.c.l.b16 %v672
      %v957 = vunpack.c.h.b16 %v672
      %v958 = vunpack.c.l.b16 %v673
      %v959 = vunpack.c.h.b16 %v673
      %v960 = vunpack.c.l.b16 %v674
      %v961 = vunpack.c.h.b16 %v674
      %v962 = vunpack.c.l.b16 %v675
      %v963 = vunpack.c.h.b16 %v675
      %v964 = vunpack.c.l.b16 %v676
      %v965 = vunpack.c.h.b16 %v676
      %v966 = vunpack.c.l.b16 %v677
      %v967 = vunpack.c.h.b16 %v677
      %v968 = vunpack.c.l.b16 %v678
      %v969 = vunpack.c.h.b16 %v678
      %v970 = vunpack.c.l.b16 %v679
      %v971 = vunpack.c.h.b16 %v679
      %v972 = vunpack.c.l.b16 %v680
      %v973 = vunpack.c.h.b16 %v680
      %v974 = vunpack.c.l.b16 %v681
      %v975 = vunpack.c.h.b16 %v681
      %v976 = vunpack.c.l.b16 %v682
      %v977 = vunpack.c.h.b16 %v682
      %v978 = vunpack.c.l.b16 %v683
      %v979 = vunpack.c.h.b16 %v683
      %v980 = vunpack.c.l.b16 %v684
      %v981 = vunpack.c.h.b16 %v684
      %v982 = vunpack.c.l.b16 %v685
      %v983 = vunpack.c.h.b16 %v685
      %v984 = vunpack.c.l.b16 %v686
      %v985 = vunpack.c.h.b16 %v686
      %v986 = vunpack.c.l.b16 %v687
      %v987 = vunpack.c.h.b16 %v687
      %v988 = vunpack.c.l.b16 %v688
      %v989 = vunpack.c.h.b16 %v688
      %v990 = vunpack.c.l.b16 %v689
      %v991 = vunpack.c.h.b16 %v689
      %v992 = vunpack.c.l.b16 %v690
      %v993 = vunpack.c.h.b16 %v690
      %v994 = vunpack.c.l.b16 %v691
      %v995 = vunpack.c.h.b16 %v691
      %v996 = vunpack.c.l.b16 %v692
      %v997 = vunpack.c.h.b16 %v692
      %v998 = vunpack.c.l.b16 %v693
      %v999 = vunpack.c.h.b16 %v693
      %v1000 = vunpack.c.l.b16 %v694
      %v1001 = vunpack.c.h.b16 %v694
      %v1002 = vunpack.c.l.b16 %v695
      %v1003 = vunpack.c.h.b16 %v695
      %v1004 = vunpack.c.l.b16 %v696
      %v1005 = vunpack.c.h.b16 %v696
      %v1006 = vunpack.c.l.b16 %v697
      %v1007 = vunpack.c.h.b16 %v697
      %v1008 = vunpack.c.l.b16 %v698
      %v1009 = vunpack.c.h.b16 %v698
      %v1010 = vunpack.c.l.b16 %v699
      %v1011 = vunpack.c.h.b16 %v699
      %v1012 = vunpack.c.l.b16 %v700
      %v1013 = vunpack.c.h.b16 %v700
      %v1014 = vunpack.c.l.b16 %v701
      %v1015 = vunpack.c.h.b16 %v701
      %v1016 = vunpack.c.l.b16 %v702
      %v1017 = vunpack.c.h.b16 %v702
      %v1018 = vunpack.c.l.b16 %v703
      %v1019 = vunpack.c.h.b16 %v703
      %v1020 = vunpack.c.l.b16 %v704
      %v1021 = vunpack.c.h.b16 %v704
      %v1022 = vunpack.c.l.b16 %v705
      %v1023 = vunpack.c.h.b16 %v705
      %v1024 = vunpack.c.l.b16 %v706
      %v1025 = vunpack.c.h.b16 %v706
      %v1026 = vunpack.c.l.b16 %v707
      %v1027 = vunpack.c.h.b16 %v707
      %v1028 = vunpack.c.l.b16 %v708
      %v1029 = vunpack.c.h.b16 %v708
      %v1030 = vunpack.c.l.b16 %v709
      %v1031 = vunpack.c.h.b16 %v709
      %v1032 = vunpack.c.l.b16 %v710
      %v1033 = vunpack.c.h.b16 %v710
      %v1034 = vunpack.c.l.b16 %v711
      %v1035 = vunpack.c.h.b16 %v711
      %v1036 = vunpack.c.l.b16 %v712
      %v1037 = vunpack.c.h.b16 %v712
      %v1038 = vunpack.c.l.b16 %v713
      %v1039 = vunpack.c.h.b16 %v713
      %v1040 = vunpack.c.l.b16 %v714
      %v1041 = vunpack.c.h.b16 %v714
      %v1042 = vunpack.c.l.b16 %v715
      %v1043 = vunpack.c.h.b16 %v715
      %v1044 = vunpack.c.l.b16 %v716
      %v1045 = vunpack.c.h.b16 %v716
      %v1046 = vunpack.c.l.b16 %v717
      %v1047 = vunpack.c.h.b16 %v717
      %v1048 = vunpack.c.l.b16 %v718
      %v1049 = vunpack.c.h.b16 %v718
      %v1050 = vunpack.c.l.b16 %v719
      %v1051 = vunpack.c.h.b16 %v719
      %v1052 = vunpack.c.l.b16 %v720
      %v1053 = vunpack.c.h.b16 %v720
      %v1054 = vunpack.c.l.b16 %v721
      %v1055 = vunpack.c.h.b16 %v721
      %v1056 = vunpack.c.l.b16 %v722
      %v1057 = vunpack.c.h.b16 %v722
      %v1058 = vunpack.c.l.b16 %v723
      %v1059 = vunpack.c.h.b16 %v723
      %v1060 = vunpack.c.l.b16 %v724
      %v1061 = vunpack.c.h.b16 %v724
      %v1062 = vunpack.c.l.b16 %v725
      %v1063 = vunpack.c.h.b16 %v725
      %v1064 = vunpack.c.l.b16 %v726
      %v1065 = vunpack.c.h.b16 %v726
      %v1066 = vunpack.c.l.b16 %v727
      %v1067 = vunpack.c.h.b16 %v727
      %v1068 = vunpack.c.l.b16 %v728
      %v1069 = vunpack.c.h.b16 %v728
      %v1070 = vunpack.c.l.b16 %v729
      %v1071 = vunpack.c.h.b16 %v729
      %v1072 = vunpack.c.l.b16 %v730
      %v1073 = vunpack.c.h.b16 %v730
      %v1074 = vunpack.c.l.b16 %v731
      %v1075 = vunpack.c.h.b16 %v731
      %v1076 = vunpack.c.l.b16 %v732
      %v1077 = vunpack.c.h.b16 %v732
      %v1078 = vunpack.c.l.b16 %v733
      %v1079 = vunpack.c.h.b16 %v733
      %v1080 = vunpack.c.l.b16 %v734
      %v1081 = vunpack.c.h.b16 %v734
      %v1082 = vunpack.c.l.b16 %v735
      %v1083 = vunpack.c.h.b16 %v735
      %v1084 = vunpack.c.l.b16 %v736
      %v1085 = vunpack.c.h.b16 %v736
      %v1086 = vunpack.c.l.b16 %v737
      %v1087 = vunpack.c.h.b16 %v737
      %v1088 = vunpack.c.l.b16 %v738
      %v1089 = vunpack.c.h.b16 %v738
      %v1090 = vunpack.c.l.b16 %v739
      %v1091 = vunpack.c.h.b16 %v739
      %v1092 = vunpack.c.l.b16 %v740
      %v1093 = vunpack.c.h.b16 %v740
      %v1094 = vunpack.c.l.b16 %v741
      %v1095 = vunpack.c.h.b16 %v741
      %v1096 = vunpack.c.l.b16 %v742
      %v1097 = vunpack.c.h.b16 %v742
      %v1098 = vunpack.c.l.b16 %v743
      %v1099 = vunpack.c.h.b16 %v743
      %v1100 = vunpack.c.l.b16 %v744
      %v1101 = vunpack.c.h.b16 %v744
      %v1102 = vunpack.c.l.b16 %v745
      %v1103 = vunpack.c.h.b16 %v745
      %v1104 = vunpack.c.l.b16 %v746
      %v1105 = vunpack.c.h.b16 %v746
      %v1106 = vunpack.c.l.b16 %v747
      %v1107 = vunpack.c.h.b16 %v747
      %v1108 = vunpack.c.l.b16 %v748
      %v1109 = vunpack.c.h.b16 %v748
      %v1110 = vunpack.c.l.b16 %v749
      %v1111 = vunpack.c.h.b16 %v749
      %v1112 = vunpack.c.l.b16 %v750
      %v1113 = vunpack.c.h.b16 %v750
      %v1114 = vunpack.c.l.b16 %v751
      %v1115 = vunpack.c.h.b16 %v751
      %v1116 = vunpack.c.l.b16 %v752
      %v1117 = vunpack.c.h.b16 %v752
      %v1118 = vunpack.c.l.b16 %v753
      %v1119 = vunpack.c.h.b16 %v753
      %v1120 = vunpack.c.l.b16 %v754
      %v1121 = vunpack.c.h.b16 %v754
      %v1122 = vunpack.c.l.b16 %v755
      %v1123 = vunpack.c.h.b16 %v755
      %v1124 = vunpack.c.l.b16 %v756
      %v1125 = vunpack.c.h.b16 %v756
      %v1126 = vunpack.c.l.b16 %v757
      %v1127 = vunpack.c.h.b16 %v757
      %v1128 = vunpack.c.l.b16 %v758
      %v1129 = vunpack.c.h.b16 %v758
      %v1130 = vunpack.c.l.b16 %v759
      %v1131 = vunpack.c.h.b16 %v759
      %v1132 = vunpack.c.l.b16 %v760
      %v1133 = vunpack.c.h.b16 %v760
      %v1134 = vunpack.c.l.b16 %v761
      %v1135 = vunpack.c.h.b16 %v761
      %v1136 = vunpack.c.l.b16 %v762
      %v1137 = vunpack.c.h.b16 %v762
      %v1138 = vunpack.c.l.b16 %v763
      %v1139 = vunpack.c.h.b16 %v763
      %v1140 = vunpack.c.l.b16 %v764
      %v1141 = vunpack.c.h.b16 %v764
      %v1142 = vunpack.c.l.b16 %v765
      %v1143 = vunpack.c.h.b16 %v765
      %v1144 = vunpack.c.l.b16 %v766
      %v1145 = vunpack.c.h.b16 %v766
      %v1146 = vunpack.c.l.b16 %v767
      %v1147 = vunpack.c.h.b16 %v767
      %v1148 = vunpack.c.l.b16 %v768
      %v1149 = vunpack.c.h.b16 %v768
      %v1150 = vunpack.c.l.b16 %v769
      %v1151 = vunpack.c.h.b16 %v769
      %v1152 = vunpack.c.l.b16 %v770
      %v1153 = vunpack.c.h.b16 %v770
      %v1154 = vunpack.c.l.b16 %v771
      %v1155 = vunpack.c.h.b16 %v771
      %v1156 = vpack.c.b16 %v908, %v900
      %v1157 = vpack.c.b16 %v909, %v901
      %v1158 = vpack.c.b16 %v910, %v902
      %v1159 = vpack.c.b16 %v911, %v903
      %v1160 = vpack.c.b16 %v912, %v904
      %v1161 = vpack.c.b16 %v913, %v905
      %v1162 = vpack.c.b16 %v914, %v906
      %v1163 = vpack.c.b16 %v915, %v907
      %v1164 = vpack.c.b16 %v924, %v916
      %v1165 = vpack.c.b16 %v925, %v917
      %v1166 = vpack.c.b16 %v926, %v918
      %v1167 = vpack.c.b16 %v927, %v919
      %v1168 = vpack.c.b16 %v928, %v920
      %v1169 = vpack.c.b16 %v929, %v921
      %v1170 = vpack.c.b16 %v930, %v922
      %v1171 = vpack.c.b16 %v931, %v923
      %v1172 = vpack.c.b16 %v940, %v932
      %v1173 = vpack.c.b16 %v941, %v933
      %v1174 = vpack.c.b16 %v942, %v934
      %v1175 = vpack.c.b16 %v943, %v935
      %v1176 = vpack.c.b16 %v944, %v936
      %v1177 = vpack.c.b16 %v945, %v937
      %v1178 = vpack.c.b16 %v946, %v938
      %v1179 = vpack.c.b16 %v947, %v939
      %v1180 = vpack.c.b16 %v956, %v948
      %v1181 = vpack.c.b16 %v957, %v949
      %v1182 = vpack.c.b16 %v958, %v950
      %v1183 = vpack.c.b16 %v959, %v951
      %v1184 = vpack.c.b16 %v960, %v952
      %v1185 = vpack.c.b16 %v961, %v953
      %v1186 = vpack.c.b16 %v962, %v954
      %v1187 = vpack.c.b16 %v963, %v955
      %v1188 = vpack.c.b16 %v972, %v964
      %v1189 = vpack.c.b16 %v973, %v965
      %v1190 = vpack.c.b16 %v974, %v966
      %v1191 = vpack.c.b16 %v975, %v967
      %v1192 = vpack.c.b16 %v976, %v968
      %v1193 = vpack.c.b16 %v977, %v969
      %v1194 = vpack.c.b16 %v978, %v970
      %v1195 = vpack.c.b16 %v979, %v971
      %v1196 = vpack.c.b16 %v988, %v980
      %v1197 = vpack.c.b16 %v989, %v981
      %v1198 = vpack.c.b16 %v990, %v982
      %v1199 = vpack.c.b16 %v991, %v983
      %v1200 = vpack.c.b16 %v992, %v984
      %v1201 = vpack.c.b16 %v993, %v985
      %v1202 = vpack.c.b16 %v994, %v986
      %v1203 = vpack.c.b16 %v995, %v987
      %v1204 = vpack.c.b16 %v1004, %v996
      %v1205 = vpack.c.b16 %v1005, %v997
      %v1206 = vpack.c.b16 %v1006, %v998
      %v1207 = vpack.c.b16 %v1007, %v999
      %v1208 = vpack.c.b16 %v1008, %v1000
      %v1209 = vpack.c.b16 %v1009, %v1001
      %v1210 = vpack.c.b16 %v1010, %v1002
      %v1211 = vpack.c.b16 %v1011, %v1003
      %v1212 = vpack.c.b16 %v1020, %v1012
      %v1213 = vpack.c.b16 %v1021, %v1013
      %v1214 = vpack.c.b16 %v1022, %v1014
      %v1215 = vpack.c.b16 %v1023, %v1015
      %v1216 = vpack.c.b16 %v1024, %v1016
      %v1217 = vpack.c.b16 %v1025, %v1017
      %v1218 = vpack.c.b16 %v1026, %v1018
      %v1219 = vpack.c.b16 %v1027, %v1019
      %v1220 = vpack.c.b16 %v1036, %v1028
      %v1221 = vpack.c.b16 %v1037, %v1029
      %v1222 = vpack.c.b16 %v1038, %v1030
      %v1223 = vpack.c.b16 %v1039, %v1031
      %v1224 = vpack.c.b16 %v1040, %v1032
      %v1225 = vpack.c.b16 %v1041, %v1033
      %v1226 = vpack.c.b16 %v1042, %v1034
      %v1227 = vpack.c.b16 %v1043, %v1035
      %v1228 = vpack.c.b16 %v1052, %v1044
      %v1229 = vpack.c.b16 %v1053, %v1045
      %v1230 = vpack.c.b16 %v1054, %v1046
      %v1231 = vpack.c.b16 %v1055, %v1047
      %v1232 = vpack.c.b16 %v1056, %v1048
      %v1233 = vpack.c.b16 %v1057, %v1049
      %v1234 = vpack.c.b16 %v1058, %v1050
      %v1235 = vpack.c.b16 %v1059, %v1051
      %v1236 = vpack.c.b16 %v1068, %v1060
      %v1237 = vpack.c.b16 %v1069, %v1061
      %v1238 = vpack.c.b16 %v1070, %v1062
      %v1239 = vpack.c.b16 %v1071, %v1063
      %v1240 = vpack.c.b16 %v1072, %v1064
      %v1241 = vpack.c.b16 %v1073, %v1065
      %v1242 = vpack.c.b16 %v1074, %v1066
      %v1243 = vpack.c.b16 %v1075, %v1067
      %v1244 = vpack.c.b16 %v1084, %v1076
      %v1245 = vpack.c.b16 %v1085, %v1077
      %v1246 = vpack.c.b16 %v1086, %v1078
      %v1247 = vpack.c.b16 %v1087, %v1079
      %v1248 = vpack.c.b16 %v1088, %v1080
      %v1249 = vpack.c.b16 %v1089, %v1081
      %v1250 = vpack.c.b16 %v1090, %v1082
      %v1251 = vpack.c.b16 %v1091, %v1083
      %v1252 = vpack.c.b16 %v1100, %v1092
      %v1253 = vpack.c.b16 %v1101, %v1093
      %v1254 = vpack.c.b16 %v1102, %v1094
      %v1255 = vpack.c.b16 %v1103, %v1095
      %v1256 = vpack.c.b16 %v1104, %v1096
      %v1257 = vpack.c.b16 %v1105, %v1097
      %v1258 = vpack.c.b16 %v1106, %v1098
      %v1259 = vpack.c.b16 %v1107, %v1099
      %v1260 = vpack.c.b16 %v1116, %v1108
      %v1261 = vpack.c.b16 %v1117, %v1109
      %v1262 = vpack.c.b16 %v1118, %v1110
      %v1263 = vpack.c.b16 %v1119, %v1111
      %v1264 = vpack.c.b16 %v1120, %v1112
      %v1265 = vpack.c.b16 %v1121, %v1113
      %v1266 = vpack.c.b16 %v1122, %v1114
      %v1267 = vpack.c.b16 %v1123, %v1115
      %v1268 = vpack.c.b16 %v1132, %v1124
      %v1269 = vpack.c.b16 %v1133, %v1125
      %v1270 = vpack.c.b16 %v1134, %v1126
      %v1271 = vpack.c.b16 %v1135, %v1127
      %v1272 = vpack.c.b16 %v1136, %v1128
      %v1273 = vpack.c.b16 %v1137, %v1129
      %v1274 = vpack.c.b16 %v1138, %v1130
      %v1275 = vpack.c.b16 %v1139, %v1131
      %v1276 = vpack.c.b16 %v1148, %v1140
      %v1277 = vpack.c.b16 %v1149, %v1141
      %v1278 = vpack.c.b16 %v1150, %v1142
      %v1279 = vpack.c.b16 %v1151, %v1143
      %v1280 = vpack.c.b16 %v1152, %v1144
      %v1281 = vpack.c.b16 %v1153, %v1145
      %v1282 = vpack.c.b16 %v1154, %v1146
      %v1283 = vpack.c.b16 %v1155, %v1147
      %1412 = vmatpush.bf16.msra.mxu0 %v1212
      %1413 = vmatpush.bf16.msra.mxu0 %v1204
      %1414 = vmatpush.bf16.msra.mxu0 %v1196
      %1415 = vmatpush.bf16.msra.mxu0 %v1188
      %1416 = vmatpush.bf16.msra.mxu0 %v1180
      %1417 = vmatpush.bf16.msra.mxu0 %v1172
      %1418 = vmatpush.bf16.msra.mxu0 %v1164
      %1419 = vmatpush.bf16.msra.mxu0 %v1156
      %1420 = vmatmul.bf16.gmra.mxu0 %v514
      %v1421 = vpop.f32.mrf.mxu0
      %v1422 = vadd.f32 0.0, %v1421
      %v1423 = vpop.f32.mrf.mxu0
      %1424 = vdwg.mxu0
      %1425 = vmatpush.bf16.msra.mxu0 %v1276
      %1426 = vmatpush.bf16.msra.mxu0 %v1268
      %1427 = vmatpush.bf16.msra.mxu0 %v1260
      %1428 = vmatpush.bf16.msra.mxu0 %v1252
      %1429 = vmatpush.bf16.msra.mxu0 %v1244
      %1430 = vmatpush.bf16.msra.mxu0 %v1236
      %1431 = vmatpush.bf16.msra.mxu0 %v1228
      %1432 = vmatpush.bf16.msra.mxu0 %v1220
      %1433 = vmatmul.bf16.gmra.mxu0 %v515
      %v1434 = vpop.f32.mrf.mxu0
      %v1435 = vadd.f32 %v1422, %v1434
      %v1436 = vpop.f32.mrf.mxu0
      %1437 = vdwg.mxu0
      %1438 = vmatpush.bf16.msra.mxu0 %v1213
      %1439 = vmatpush.bf16.msra.mxu0 %v1205
      %1440 = vmatpush.bf16.msra.mxu0 %v1197
      %1441 = vmatpush.bf16.msra.mxu0 %v1189
      %1442 = vmatpush.bf16.msra.mxu0 %v1181
      %1443 = vmatpush.bf16.msra.mxu0 %v1173
      %1444 = vmatpush.bf16.msra.mxu0 %v1165
      %1445 = vmatpush.bf16.msra.mxu0 %v1157
      %1446 = vmatmul.bf16.gmra.mxu0 %v514
      %v1447 = vpop.f32.mrf.mxu0
      %v1448 = vadd.f32 0.0, %v1447
      %v1449 = vpop.f32.mrf.mxu0
      %1450 = vdwg.mxu0
      %1451 = vmatpush.bf16.msra.mxu0 %v1277
      %1452 = vmatpush.bf16.msra.mxu0 %v1269
      %1453 = vmatpush.bf16.msra.mxu0 %v1261
      %1454 = vmatpush.bf16.msra.mxu0 %v1253
      %1455 = vmatpush.bf16.msra.mxu0 %v1245
      %1456 = vmatpush.bf16.msra.mxu0 %v1237
      %1457 = vmatpush.bf16.msra.mxu0 %v1229
      %1458 = vmatpush.bf16.msra.mxu0 %v1221
      %1459 = vmatmul.bf16.gmra.mxu0 %v515
      %v1460 = vpop.f32.mrf.mxu0
      %v1461 = vadd.f32 %v1448, %v1460
      %v1462 = vpop.f32.mrf.mxu0
      %1463 = vdwg.mxu0
      %1464 = vmatpush.bf16.msra.mxu0 %v1214
      %1465 = vmatpush.bf16.msra.mxu0 %v1206
      %1466 = vmatpush.bf16.msra.mxu0 %v1198
      %1467 = vmatpush.bf16.msra.mxu0 %v1190
      %1468 = vmatpush.bf16.msra.mxu0 %v1182
      %1469 = vmatpush.bf16.msra.mxu0 %v1174
      %1470 = vmatpush.bf16.msra.mxu0 %v1166
      %1471 = vmatpush.bf16.msra.mxu0 %v1158
      %1472 = vmatmul.bf16.gmra.mxu0 %v514
      %v1473 = vpop.f32.mrf.mxu0
      %v1474 = vadd.f32 0.0, %v1473
      %v1475 = vpop.f32.mrf.mxu0
      %1476 = vdwg.mxu0
      %1477 = vmatpush.bf16.msra.mxu0 %v1278
      %1478 = vmatpush.bf16.msra.mxu0 %v1270
      %1479 = vmatpush.bf16.msra.mxu0 %v1262
      %1480 = vmatpush.bf16.msra.mxu0 %v1254
      %1481 = vmatpush.bf16.msra.mxu0 %v1246
      %1482 = vmatpush.bf16.msra.mxu0 %v1238
      %1483 = vmatpush.bf16.msra.mxu0 %v1230
      %1484 = vmatpush.bf16.msra.mxu0 %v1222
      %1485 = vmatmul.bf16.gmra.mxu0 %v515
      %v1486 = vpop.f32.mrf.mxu0
      %v1487 = vadd.f32 %v1474, %v1486
      %v1488 = vpop.f32.mrf.mxu0
      %1489 = vdwg.mxu0
      %1490 = vmatpush.bf16.msra.mxu0 %v1215
      %1491 = vmatpush.bf16.msra.mxu0 %v1207
      %1492 = vmatpush.bf16.msra.mxu0 %v1199
      %1493 = vmatpush.bf16.msra.mxu0 %v1191
      %1494 = vmatpush.bf16.msra.mxu0 %v1183
      %1495 = vmatpush.bf16.msra.mxu0 %v1175
      %1496 = vmatpush.bf16.msra.mxu0 %v1167
      %1497 = vmatpush.bf16.msra.mxu0 %v1159
      %1498 = vmatmul.bf16.gmra.mxu0 %v514
      %v1499 = vpop.f32.mrf.mxu0
      %v1500 = vadd.f32 0.0, %v1499
      %v1501 = vpop.f32.mrf.mxu0
      %1502 = vdwg.mxu0
      %1503 = vmatpush.bf16.msra.mxu0 %v1279
      %1504 = vmatpush.bf16.msra.mxu0 %v1271
      %1505 = vmatpush.bf16.msra.mxu0 %v1263
      %1506 = vmatpush.bf16.msra.mxu0 %v1255
      %1507 = vmatpush.bf16.msra.mxu0 %v1247
      %1508 = vmatpush.bf16.msra.mxu0 %v1239
      %1509 = vmatpush.bf16.msra.mxu0 %v1231
      %1510 = vmatpush.bf16.msra.mxu0 %v1223
      %1511 = vmatmul.bf16.gmra.mxu0 %v515
      %v1512 = vpop.f32.mrf.mxu0
      %v1513 = vadd.f32 %v1500, %v1512
      %v1514 = vpop.f32.mrf.mxu0
      %1515 = vdwg.mxu0
      %1516 = vmatpush.bf16.msra.mxu0 %v1216
      %1517 = vmatpush.bf16.msra.mxu0 %v1208
      %1518 = vmatpush.bf16.msra.mxu0 %v1200
      %1519 = vmatpush.bf16.msra.mxu0 %v1192
      %1520 = vmatpush.bf16.msra.mxu0 %v1184
      %1521 = vmatpush.bf16.msra.mxu0 %v1176
      %1522 = vmatpush.bf16.msra.mxu0 %v1168
      %1523 = vmatpush.bf16.msra.mxu0 %v1160
      %1524 = vmatmul.bf16.gmra.mxu0 %v514
      %v1525 = vpop.f32.mrf.mxu0
      %v1526 = vadd.f32 0.0, %v1525
      %v1527 = vpop.f32.mrf.mxu0
      %1528 = vdwg.mxu0
      %1529 = vmatpush.bf16.msra.mxu0 %v1280
      %1530 = vmatpush.bf16.msra.mxu0 %v1272
      %1531 = vmatpush.bf16.msra.mxu0 %v1264
      %1532 = vmatpush.bf16.msra.mxu0 %v1256
      %1533 = vmatpush.bf16.msra.mxu0 %v1248
      %1534 = vmatpush.bf16.msra.mxu0 %v1240
      %1535 = vmatpush.bf16.msra.mxu0 %v1232
      %1536 = vmatpush.bf16.msra.mxu0 %v1224
      %1537 = vmatmul.bf16.gmra.mxu0 %v515
      %v1538 = vpop.f32.mrf.mxu0
      %v1539 = vadd.f32 %v1526, %v1538
      %v1540 = vpop.f32.mrf.mxu0
      %1541 = vdwg.mxu0
      %1542 = vmatpush.bf16.msra.mxu0 %v1217
      %1543 = vmatpush.bf16.msra.mxu0 %v1209
      %1544 = vmatpush.bf16.msra.mxu0 %v1201
      %1545 = vmatpush.bf16.msra.mxu0 %v1193
      %1546 = vmatpush.bf16.msra.mxu0 %v1185
      %1547 = vmatpush.bf16.msra.mxu0 %v1177
      %1548 = vmatpush.bf16.msra.mxu0 %v1169
      %1549 = vmatpush.bf16.msra.mxu0 %v1161
      %1550 = vmatmul.bf16.gmra.mxu0 %v514
      %v1551 = vpop.f32.mrf.mxu0
      %v1552 = vadd.f32 0.0, %v1551
      %v1553 = vpop.f32.mrf.mxu0
      %1554 = vdwg.mxu0
      %1555 = vmatpush.bf16.msra.mxu0 %v1281
      %1556 = vmatpush.bf16.msra.mxu0 %v1273
      %1557 = vmatpush.bf16.msra.mxu0 %v1265
      %1558 = vmatpush.bf16.msra.mxu0 %v1257
      %1559 = vmatpush.bf16.msra.mxu0 %v1249
      %1560 = vmatpush.bf16.msra.mxu0 %v1241
      %1561 = vmatpush.bf16.msra.mxu0 %v1233
      %1562 = vmatpush.bf16.msra.mxu0 %v1225
      %1563 = vmatmul.bf16.gmra.mxu0 %v515
      %v1564 = vpop.f32.mrf.mxu0
      %v1565 = vadd.f32 %v1552, %v1564
      %v1566 = vpop.f32.mrf.mxu0
      %1567 = vdwg.mxu0
      %1568 = vmatpush.bf16.msra.mxu0 %v1218
      %1569 = vmatpush.bf16.msra.mxu0 %v1210
      %1570 = vmatpush.bf16.msra.mxu0 %v1202
      %1571 = vmatpush.bf16.msra.mxu0 %v1194
      %1572 = vmatpush.bf16.msra.mxu0 %v1186
      %1573 = vmatpush.bf16.msra.mxu0 %v1178
      %1574 = vmatpush.bf16.msra.mxu0 %v1170
      %1575 = vmatpush.bf16.msra.mxu0 %v1162
      %1576 = vmatmul.bf16.gmra.mxu0 %v514
      %v1577 = vpop.f32.mrf.mxu0
      %v1578 = vadd.f32 0.0, %v1577
      %v1579 = vpop.f32.mrf.mxu0
      %1580 = vdwg.mxu0
      %1581 = vmatpush.bf16.msra.mxu0 %v1282
      %1582 = vmatpush.bf16.msra.mxu0 %v1274
      %1583 = vmatpush.bf16.msra.mxu0 %v1266
      %1584 = vmatpush.bf16.msra.mxu0 %v1258
      %1585 = vmatpush.bf16.msra.mxu0 %v1250
      %1586 = vmatpush.bf16.msra.mxu0 %v1242
      %1587 = vmatpush.bf16.msra.mxu0 %v1234
      %1588 = vmatpush.bf16.msra.mxu0 %v1226
      %1589 = vmatmul.bf16.gmra.mxu0 %v515
      %v1590 = vpop.f32.mrf.mxu0
      %v1591 = vadd.f32 %v1578, %v1590
      %v1592 = vpop.f32.mrf.mxu0
      %1593 = vdwg.mxu0
      %1594 = vmatpush.bf16.msra.mxu0 %v1219
      %1595 = vmatpush.bf16.msra.mxu0 %v1211
      %1596 = vmatpush.bf16.msra.mxu0 %v1203
      %1597 = vmatpush.bf16.msra.mxu0 %v1195
      %1598 = vmatpush.bf16.msra.mxu0 %v1187
      %1599 = vmatpush.bf16.msra.mxu0 %v1179
      %1600 = vmatpush.bf16.msra.mxu0 %v1171
      %1601 = vmatpush.bf16.msra.mxu0 %v1163
      %1602 = vmatmul.bf16.gmra.mxu0 %v514
      %v1603 = vpop.f32.mrf.mxu0
      %v1604 = vadd.f32 0.0, %v1603
      %v1605 = vpop.f32.mrf.mxu0
      %1606 = vdwg.mxu0
      %1607 = vmatpush.bf16.msra.mxu0 %v1283
      %1608 = vmatpush.bf16.msra.mxu0 %v1275
      %1609 = vmatpush.bf16.msra.mxu0 %v1267
      %1610 = vmatpush.bf16.msra.mxu0 %v1259
      %1611 = vmatpush.bf16.msra.mxu0 %v1251
      %1612 = vmatpush.bf16.msra.mxu0 %v1243
      %1613 = vmatpush.bf16.msra.mxu0 %v1235
      %1614 = vmatpush.bf16.msra.mxu0 %v1227
      %1615 = vmatmul.bf16.gmra.mxu0 %v515
      %v1616 = vpop.f32.mrf.mxu0
      %v1617 = vadd.f32 %v1604, %v1616
      %v1618 = vpop.f32.mrf.mxu0
      %1619 = vdwg.mxu0
      %v1748 = vunpack.c.l.b16 %v516
      %v1749 = vunpack.c.h.b16 %v516
      %v1750 = vunpack.c.l.b16 %v517
      %v1751 = vunpack.c.h.b16 %v517
      %v1752 = vunpack.c.l.b16 %v518
      %v1753 = vunpack.c.h.b16 %v518
      %v1754 = vunpack.c.l.b16 %v519
      %v1755 = vunpack.c.h.b16 %v519
      %v1756 = vunpack.c.l.b16 %v520
      %v1757 = vunpack.c.h.b16 %v520
      %v1758 = vunpack.c.l.b16 %v521
      %v1759 = vunpack.c.h.b16 %v521
      %v1760 = vunpack.c.l.b16 %v522
      %v1761 = vunpack.c.h.b16 %v522
      %v1762 = vunpack.c.l.b16 %v523
      %v1763 = vunpack.c.h.b16 %v523
      %v1764 = vunpack.c.l.b16 %v524
      %v1765 = vunpack.c.h.b16 %v524
      %v1766 = vunpack.c.l.b16 %v525
      %v1767 = vunpack.c.h.b16 %v525
      %v1768 = vunpack.c.l.b16 %v526
      %v1769 = vunpack.c.h.b16 %v526
      %v1770 = vunpack.c.l.b16 %v527
      %v1771 = vunpack.c.h.b16 %v527
      %v1772 = vunpack.c.l.b16 %v528
      %v1773 = vunpack.c.h.b16 %v528
      %v1774 = vunpack.c.l.b16 %v529
      %v1775 = vunpack.c.h.b16 %v529
      %v1776 = vunpack.c.l.b16 %v530
      %v1777 = vunpack.c.h.b16 %v530
      %v1778 = vunpack.c.l.b16 %v531
      %v1779 = vunpack.c.h.b16 %v531
      %v1780 = vunpack.c.l.b16 %v532
      %v1781 = vunpack.c.h.b16 %v532
      %v1782 = vunpack.c.l.b16 %v533
      %v1783 = vunpack.c.h.b16 %v533
      %v1784 = vunpack.c.l.b16 %v534
      %v1785 = vunpack.c.h.b16 %v534
      %v1786 = vunpack.c.l.b16 %v535
      %v1787 = vunpack.c.h.b16 %v535
      %v1788 = vunpack.c.l.b16 %v536
      %v1789 = vunpack.c.h.b16 %v536
      %v1790 = vunpack.c.l.b16 %v537
      %v1791 = vunpack.c.h.b16 %v537
      %v1792 = vunpack.c.l.b16 %v538
      %v1793 = vunpack.c.h.b16 %v538
      %v1794 = vunpack.c.l.b16 %v539
      %v1795 = vunpack.c.h.b16 %v539
      %v1796 = vunpack.c.l.b16 %v540
      %v1797 = vunpack.c.h.b16 %v540
      %v1798 = vunpack.c.l.b16 %v541
      %v1799 = vunpack.c.h.b16 %v541
      %v1800 = vunpack.c.l.b16 %v542
      %v1801 = vunpack.c.h.b16 %v542
      %v1802 = vunpack.c.l.b16 %v543
      %v1803 = vunpack.c.h.b16 %v543
      %v1804 = vunpack.c.l.b16 %v544
      %v1805 = vunpack.c.h.b16 %v544
      %v1806 = vunpack.c.l.b16 %v545
      %v1807 = vunpack.c.h.b16 %v545
      %v1808 = vunpack.c.l.b16 %v546
      %v1809 = vunpack.c.h.b16 %v546
      %v1810 = vunpack.c.l.b16 %v547
      %v1811 = vunpack.c.h.b16 %v547
      %v1812 = vunpack.c.l.b16 %v548
      %v1813 = vunpack.c.h.b16 %v548
      %v1814 = vunpack.c.l.b16 %v549
      %v1815 = vunpack.c.h.b16 %v549
      %v1816 = vunpack.c.l.b16 %v550
      %v1817 = vunpack.c.h.b16 %v550
      %v1818 = vunpack.c.l.b16 %v551
      %v1819 = vunpack.c.h.b16 %v551
      %v1820 = vunpack.c.l.b16 %v552
      %v1821 = vunpack.c.h.b16 %v552
      %v1822 = vunpack.c.l.b16 %v553
      %v1823 = vunpack.c.h.b16 %v553
      %v1824 = vunpack.c.l.b16 %v554
      %v1825 = vunpack.c.h.b16 %v554
      %v1826 = vunpack.c.l.b16 %v555
      %v1827 = vunpack.c.h.b16 %v555
      %v1828 = vunpack.c.l.b16 %v556
      %v1829 = vunpack.c.h.b16 %v556
      %v1830 = vunpack.c.l.b16 %v557
      %v1831 = vunpack.c.h.b16 %v557
      %v1832 = vunpack.c.l.b16 %v558
      %v1833 = vunpack.c.h.b16 %v558
      %v1834 = vunpack.c.l.b16 %v559
      %v1835 = vunpack.c.h.b16 %v559
      %v1836 = vunpack.c.l.b16 %v560
      %v1837 = vunpack.c.h.b16 %v560
      %v1838 = vunpack.c.l.b16 %v561
      %v1839 = vunpack.c.h.b16 %v561
      %v1840 = vunpack.c.l.b16 %v562
      %v1841 = vunpack.c.h.b16 %v562
      %v1842 = vunpack.c.l.b16 %v563
      %v1843 = vunpack.c.h.b16 %v563
      %v1844 = vunpack.c.l.b16 %v564
      %v1845 = vunpack.c.h.b16 %v564
      %v1846 = vunpack.c.l.b16 %v565
      %v1847 = vunpack.c.h.b16 %v565
      %v1848 = vunpack.c.l.b16 %v566
      %v1849 = vunpack.c.h.b16 %v566
      %v1850 = vunpack.c.l.b16 %v567
      %v1851 = vunpack.c.h.b16 %v567
      %v1852 = vunpack.c.l.b16 %v568
      %v1853 = vunpack.c.h.b16 %v568
      %v1854 = vunpack.c.l.b16 %v569
      %v1855 = vunpack.c.h.b16 %v569
      %v1856 = vunpack.c.l.b16 %v570
      %v1857 = vunpack.c.h.b16 %v570
      %v1858 = vunpack.c.l.b16 %v571
      %v1859 = vunpack.c.h.b16 %v571
      %v1860 = vunpack.c.l.b16 %v572
      %v1861 = vunpack.c.h.b16 %v572
      %v1862 = vunpack.c.l.b16 %v573
      %v1863 = vunpack.c.h.b16 %v573
      %v1864 = vunpack.c.l.b16 %v574
      %v1865 = vunpack.c.h.b16 %v574
      %v1866 = vunpack.c.l.b16 %v575
      %v1867 = vunpack.c.h.b16 %v575
      %v1868 = vunpack.c.l.b16 %v576
      %v1869 = vunpack.c.h.b16 %v576
      %v1870 = vunpack.c.l.b16 %v577
      %v1871 = vunpack.c.h.b16 %v577
      %v1872 = vunpack.c.l.b16 %v578
      %v1873 = vunpack.c.h.b16 %v578
      %v1874 = vunpack.c.l.b16 %v579
      %v1875 = vunpack.c.h.b16 %v579
      %v1876 = vunpack.c.l.b16 %v580
      %v1877 = vunpack.c.h.b16 %v580
      %v1878 = vunpack.c.l.b16 %v581
      %v1879 = vunpack.c.h.b16 %v581
      %v1880 = vunpack.c.l.b16 %v582
      %v1881 = vunpack.c.h.b16 %v582
      %v1882 = vunpack.c.l.b16 %v583
      %v1883 = vunpack.c.h.b16 %v583
      %v1884 = vunpack.c.l.b16 %v584
      %v1885 = vunpack.c.h.b16 %v584
      %v1886 = vunpack.c.l.b16 %v585
      %v1887 = vunpack.c.h.b16 %v585
      %v1888 = vunpack.c.l.b16 %v586
      %v1889 = vunpack.c.h.b16 %v586
      %v1890 = vunpack.c.l.b16 %v587
      %v1891 = vunpack.c.h.b16 %v587
      %v1892 = vunpack.c.l.b16 %v588
      %v1893 = vunpack.c.h.b16 %v588
      %v1894 = vunpack.c.l.b16 %v589
      %v1895 = vunpack.c.h.b16 %v589
      %v1896 = vunpack.c.l.b16 %v590
      %v1897 = vunpack.c.h.b16 %v590
      %v1898 = vunpack.c.l.b16 %v591
      %v1899 = vunpack.c.h.b16 %v591
      %v1900 = vunpack.c.l.b16 %v592
      %v1901 = vunpack.c.h.b16 %v592
      %v1902 = vunpack.c.l.b16 %v593
      %v1903 = vunpack.c.h.b16 %v593
      %v1904 = vunpack.c.l.b16 %v594
      %v1905 = vunpack.c.h.b16 %v594
      %v1906 = vunpack.c.l.b16 %v595
      %v1907 = vunpack.c.h.b16 %v595
      %v1908 = vunpack.c.l.b16 %v596
      %v1909 = vunpack.c.h.b16 %v596
      %v1910 = vunpack.c.l.b16 %v597
      %v1911 = vunpack.c.h.b16 %v597
      %v1912 = vunpack.c.l.b16 %v598
      %v1913 = vunpack.c.h.b16 %v598
      %v1914 = vunpack.c.l.b16 %v599
      %v1915 = vunpack.c.h.b16 %v599
      %v1916 = vunpack.c.l.b16 %v600
      %v1917 = vunpack.c.h.b16 %v600
      %v1918 = vunpack.c.l.b16 %v601
      %v1919 = vunpack.c.h.b16 %v601
      %v1920 = vunpack.c.l.b16 %v602
      %v1921 = vunpack.c.h.b16 %v602
      %v1922 = vunpack.c.l.b16 %v603
      %v1923 = vunpack.c.h.b16 %v603
      %v1924 = vunpack.c.l.b16 %v604
      %v1925 = vunpack.c.h.b16 %v604
      %v1926 = vunpack.c.l.b16 %v605
      %v1927 = vunpack.c.h.b16 %v605
      %v1928 = vunpack.c.l.b16 %v606
      %v1929 = vunpack.c.h.b16 %v606
      %v1930 = vunpack.c.l.b16 %v607
      %v1931 = vunpack.c.h.b16 %v607
      %v1932 = vunpack.c.l.b16 %v608
      %v1933 = vunpack.c.h.b16 %v608
      %v1934 = vunpack.c.l.b16 %v609
      %v1935 = vunpack.c.h.b16 %v609
      %v1936 = vunpack.c.l.b16 %v610
      %v1937 = vunpack.c.h.b16 %v610
      %v1938 = vunpack.c.l.b16 %v611
      %v1939 = vunpack.c.h.b16 %v611
      %v1940 = vunpack.c.l.b16 %v612
      %v1941 = vunpack.c.h.b16 %v612
      %v1942 = vunpack.c.l.b16 %v613
      %v1943 = vunpack.c.h.b16 %v613
      %v1944 = vunpack.c.l.b16 %v614
      %v1945 = vunpack.c.h.b16 %v614
      %v1946 = vunpack.c.l.b16 %v615
      %v1947 = vunpack.c.h.b16 %v615
      %v1948 = vunpack.c.l.b16 %v616
      %v1949 = vunpack.c.h.b16 %v616
      %v1950 = vunpack.c.l.b16 %v617
      %v1951 = vunpack.c.h.b16 %v617
      %v1952 = vunpack.c.l.b16 %v618
      %v1953 = vunpack.c.h.b16 %v618
      %v1954 = vunpack.c.l.b16 %v619
      %v1955 = vunpack.c.h.b16 %v619
      %v1956 = vunpack.c.l.b16 %v620
      %v1957 = vunpack.c.h.b16 %v620
      %v1958 = vunpack.c.l.b16 %v621
      %v1959 = vunpack.c.h.b16 %v621
      %v1960 = vunpack.c.l.b16 %v622
      %v1961 = vunpack.c.h.b16 %v622
      %v1962 = vunpack.c.l.b16 %v623
      %v1963 = vunpack.c.h.b16 %v623
      %v1964 = vunpack.c.l.b16 %v624
      %v1965 = vunpack.c.h.b16 %v624
      %v1966 = vunpack.c.l.b16 %v625
      %v1967 = vunpack.c.h.b16 %v625
      %v1968 = vunpack.c.l.b16 %v626
      %v1969 = vunpack.c.h.b16 %v626
      %v1970 = vunpack.c.l.b16 %v627
      %v1971 = vunpack.c.h.b16 %v627
      %v1972 = vunpack.c.l.b16 %v628
      %v1973 = vunpack.c.h.b16 %v628
      %v1974 = vunpack.c.l.b16 %v629
      %v1975 = vunpack.c.h.b16 %v629
      %v1976 = vunpack.c.l.b16 %v630
      %v1977 = vunpack.c.h.b16 %v630
      %v1978 = vunpack.c.l.b16 %v631
      %v1979 = vunpack.c.h.b16 %v631
      %v1980 = vunpack.c.l.b16 %v632
      %v1981 = vunpack.c.h.b16 %v632
      %v1982 = vunpack.c.l.b16 %v633
      %v1983 = vunpack.c.h.b16 %v633
      %v1984 = vunpack.c.l.b16 %v634
      %v1985 = vunpack.c.h.b16 %v634
      %v1986 = vunpack.c.l.b16 %v635
      %v1987 = vunpack.c.h.b16 %v635
      %v1988 = vunpack.c.l.b16 %v636
      %v1989 = vunpack.c.h.b16 %v636
      %v1990 = vunpack.c.l.b16 %v637
      %v1991 = vunpack.c.h.b16 %v637
      %v1992 = vunpack.c.l.b16 %v638
      %v1993 = vunpack.c.h.b16 %v638
      %v1994 = vunpack.c.l.b16 %v639
      %v1995 = vunpack.c.h.b16 %v639
      %v1996 = vunpack.c.l.b16 %v640
      %v1997 = vunpack.c.h.b16 %v640
      %v1998 = vunpack.c.l.b16 %v641
      %v1999 = vunpack.c.h.b16 %v641
      %v2000 = vunpack.c.l.b16 %v642
      %v2001 = vunpack.c.h.b16 %v642
      %v2002 = vunpack.c.l.b16 %v643
      %v2003 = vunpack.c.h.b16 %v643
      %v2004 = vpack.c.b16 %v1756, %v1748
      %v2005 = vpack.c.b16 %v1757, %v1749
      %v2006 = vpack.c.b16 %v1758, %v1750
      %v2007 = vpack.c.b16 %v1759, %v1751
      %v2008 = vpack.c.b16 %v1760, %v1752
      %v2009 = vpack.c.b16 %v1761, %v1753
      %v2010 = vpack.c.b16 %v1762, %v1754
      %v2011 = vpack.c.b16 %v1763, %v1755
      %v2012 = vpack.c.b16 %v1772, %v1764
      %v2013 = vpack.c.b16 %v1773, %v1765
      %v2014 = vpack.c.b16 %v1774, %v1766
      %v2015 = vpack.c.b16 %v1775, %v1767
      %v2016 = vpack.c.b16 %v1776, %v1768
      %v2017 = vpack.c.b16 %v1777, %v1769
      %v2018 = vpack.c.b16 %v1778, %v1770
      %v2019 = vpack.c.b16 %v1779, %v1771
      %v2020 = vpack.c.b16 %v1788, %v1780
      %v2021 = vpack.c.b16 %v1789, %v1781
      %v2022 = vpack.c.b16 %v1790, %v1782
      %v2023 = vpack.c.b16 %v1791, %v1783
      %v2024 = vpack.c.b16 %v1792, %v1784
      %v2025 = vpack.c.b16 %v1793, %v1785
      %v2026 = vpack.c.b16 %v1794, %v1786
      %v2027 = vpack.c.b16 %v1795, %v1787
      %v2028 = vpack.c.b16 %v1804, %v1796
      %v2029 = vpack.c.b16 %v1805, %v1797
      %v2030 = vpack.c.b16 %v1806, %v1798
      %v2031 = vpack.c.b16 %v1807, %v1799
      %v2032 = vpack.c.b16 %v1808, %v1800
      %v2033 = vpack.c.b16 %v1809, %v1801
      %v2034 = vpack.c.b16 %v1810, %v1802
      %v2035 = vpack.c.b16 %v1811, %v1803
      %v2036 = vpack.c.b16 %v1820, %v1812
      %v2037 = vpack.c.b16 %v1821, %v1813
      %v2038 = vpack.c.b16 %v1822, %v1814
      %v2039 = vpack.c.b16 %v1823, %v1815
      %v2040 = vpack.c.b16 %v1824, %v1816
      %v2041 = vpack.c.b16 %v1825, %v1817
      %v2042 = vpack.c.b16 %v1826, %v1818
      %v2043 = vpack.c.b16 %v1827, %v1819
      %v2044 = vpack.c.b16 %v1836, %v1828
      %v2045 = vpack.c.b16 %v1837, %v1829
      %v2046 = vpack.c.b16 %v1838, %v1830
      %v2047 = vpack.c.b16 %v1839, %v1831
      %v2048 = vpack.c.b16 %v1840, %v1832
      %v2049 = vpack.c.b16 %v1841, %v1833
      %v2050 = vpack.c.b16 %v1842, %v1834
      %v2051 = vpack.c.b16 %v1843, %v1835
      %v2052 = vpack.c.b16 %v1852, %v1844
      %v2053 = vpack.c.b16 %v1853, %v1845
      %v2054 = vpack.c.b16 %v1854, %v1846
      %v2055 = vpack.c.b16 %v1855, %v1847
      %v2056 = vpack.c.b16 %v1856, %v1848
      %v2057 = vpack.c.b16 %v1857, %v1849
      %v2058 = vpack.c.b16 %v1858, %v1850
      %v2059 = vpack.c.b16 %v1859, %v1851
      %v2060 = vpack.c.b16 %v1868, %v1860
      %v2061 = vpack.c.b16 %v1869, %v1861
      %v2062 = vpack.c.b16 %v1870, %v1862
      %v2063 = vpack.c.b16 %v1871, %v1863
      %v2064 = vpack.c.b16 %v1872, %v1864
      %v2065 = vpack.c.b16 %v1873, %v1865
      %v2066 = vpack.c.b16 %v1874, %v1866
      %v2067 = vpack.c.b16 %v1875, %v1867
      %v2068 = vpack.c.b16 %v1884, %v1876
      %v2069 = vpack.c.b16 %v1885, %v1877
      %v2070 = vpack.c.b16 %v1886, %v1878
      %v2071 = vpack.c.b16 %v1887, %v1879
      %v2072 = vpack.c.b16 %v1888, %v1880
      %v2073 = vpack.c.b16 %v1889, %v1881
      %v2074 = vpack.c.b16 %v1890, %v1882
      %v2075 = vpack.c.b16 %v1891, %v1883
      %v2076 = vpack.c.b16 %v1900, %v1892
      %v2077 = vpack.c.b16 %v1901, %v1893
      %v2078 = vpack.c.b16 %v1902, %v1894
      %v2079 = vpack.c.b16 %v1903, %v1895
      %v2080 = vpack.c.b16 %v1904, %v1896
      %v2081 = vpack.c.b16 %v1905, %v1897
      %v2082 = vpack.c.b16 %v1906, %v1898
      %v2083 = vpack.c.b16 %v1907, %v1899
      %v2084 = vpack.c.b16 %v1916, %v1908
      %v2085 = vpack.c.b16 %v1917, %v1909
      %v2086 = vpack.c.b16 %v1918, %v1910
      %v2087 = vpack.c.b16 %v1919, %v1911
      %v2088 = vpack.c.b16 %v1920, %v1912
      %v2089 = vpack.c.b16 %v1921, %v1913
      %v2090 = vpack.c.b16 %v1922, %v1914
      %v2091 = vpack.c.b16 %v1923, %v1915
      %v2092 = vpack.c.b16 %v1932, %v1924
      %v2093 = vpack.c.b16 %v1933, %v1925
      %v2094 = vpack.c.b16 %v1934, %v1926
      %v2095 = vpack.c.b16 %v1935, %v1927
      %v2096 = vpack.c.b16 %v1936, %v1928
      %v2097 = vpack.c.b16 %v1937, %v1929
      %v2098 = vpack.c.b16 %v1938, %v1930
      %v2099 = vpack.c.b16 %v1939, %v1931
      %v2100 = vpack.c.b16 %v1948, %v1940
      %v2101 = vpack.c.b16 %v1949, %v1941
      %v2102 = vpack.c.b16 %v1950, %v1942
      %v2103 = vpack.c.b16 %v1951, %v1943
      %v2104 = vpack.c.b16 %v1952, %v1944
      %v2105 = vpack.c.b16 %v1953, %v1945
      %v2106 = vpack.c.b16 %v1954, %v1946
      %v2107 = vpack.c.b16 %v1955, %v1947
      %v2108 = vpack.c.b16 %v1964, %v1956
      %v2109 = vpack.c.b16 %v1965, %v1957
      %v2110 = vpack.c.b16 %v1966, %v1958
      %v2111 = vpack.c.b16 %v1967, %v1959
      %v2112 = vpack.c.b16 %v1968, %v1960
      %v2113 = vpack.c.b16 %v1969, %v1961
      %v2114 = vpack.c.b16 %v1970, %v1962
      %v2115 = vpack.c.b16 %v1971, %v1963
      %v2116 = vpack.c.b16 %v1980, %v1972
      %v2117 = vpack.c.b16 %v1981, %v1973
      %v2118 = vpack.c.b16 %v1982, %v1974
      %v2119 = vpack.c.b16 %v1983, %v1975
      %v2120 = vpack.c.b16 %v1984, %v1976
      %v2121 = vpack.c.b16 %v1985, %v1977
      %v2122 = vpack.c.b16 %v1986, %v1978
      %v2123 = vpack.c.b16 %v1987, %v1979
      %v2124 = vpack.c.b16 %v1996, %v1988
      %v2125 = vpack.c.b16 %v1997, %v1989
      %v2126 = vpack.c.b16 %v1998, %v1990
      %v2127 = vpack.c.b16 %v1999, %v1991
      %v2128 = vpack.c.b16 %v2000, %v1992
      %v2129 = vpack.c.b16 %v2001, %v1993
      %v2130 = vpack.c.b16 %v2002, %v1994
      %v2131 = vpack.c.b16 %v2003, %v1995
      %2260 = vmatpush.bf16.msra.mxu0 %v2060
      %2261 = vmatpush.bf16.msra.mxu0 %v2052
      %2262 = vmatpush.bf16.msra.mxu0 %v2044
      %2263 = vmatpush.bf16.msra.mxu0 %v2036
      %2264 = vmatpush.bf16.msra.mxu0 %v2028
      %2265 = vmatpush.bf16.msra.mxu0 %v2020
      %2266 = vmatpush.bf16.msra.mxu0 %v2012
      %2267 = vmatpush.bf16.msra.mxu0 %v2004
      %2268 = vmatmul.bf16.gmra.mxu0 %v510
      %v2269 = vpop.f32.mrf.mxu0
      %v2270 = vadd.f32 %v1435, %v2269
      %v2271 = vpop.f32.mrf.mxu0
      %2272 = vdwg.mxu0
      %2273 = vmatpush.bf16.msra.mxu0 %v2124
      %2274 = vmatpush.bf16.msra.mxu0 %v2116
      %2275 = vmatpush.bf16.msra.mxu0 %v2108
      %2276 = vmatpush.bf16.msra.mxu0 %v2100
      %2277 = vmatpush.bf16.msra.mxu0 %v2092
      %2278 = vmatpush.bf16.msra.mxu0 %v2084
      %2279 = vmatpush.bf16.msra.mxu0 %v2076
      %2280 = vmatpush.bf16.msra.mxu0 %v2068
      %2281 = vmatmul.bf16.gmra.mxu0 %v511
      %v2282 = vpop.f32.mrf.mxu0
      %v2283 = vadd.f32 %v2270, %v2282
      %v2284 = vpop.f32.mrf.mxu0
      %2285 = vdwg.mxu0
      %2286 = vmatpush.bf16.msra.mxu0 %v2061
      %2287 = vmatpush.bf16.msra.mxu0 %v2053
      %2288 = vmatpush.bf16.msra.mxu0 %v2045
      %2289 = vmatpush.bf16.msra.mxu0 %v2037
      %2290 = vmatpush.bf16.msra.mxu0 %v2029
      %2291 = vmatpush.bf16.msra.mxu0 %v2021
      %2292 = vmatpush.bf16.msra.mxu0 %v2013
      %2293 = vmatpush.bf16.msra.mxu0 %v2005
      %2294 = vmatmul.bf16.gmra.mxu0 %v510
      %v2295 = vpop.f32.mrf.mxu0
      %v2296 = vadd.f32 %v1461, %v2295
      %v2297 = vpop.f32.mrf.mxu0
      %2298 = vdwg.mxu0
      %2299 = vmatpush.bf16.msra.mxu0 %v2125
      %2300 = vmatpush.bf16.msra.mxu0 %v2117
      %2301 = vmatpush.bf16.msra.mxu0 %v2109
      %2302 = vmatpush.bf16.msra.mxu0 %v2101
      %2303 = vmatpush.bf16.msra.mxu0 %v2093
      %2304 = vmatpush.bf16.msra.mxu0 %v2085
      %2305 = vmatpush.bf16.msra.mxu0 %v2077
      %2306 = vmatpush.bf16.msra.mxu0 %v2069
      %2307 = vmatmul.bf16.gmra.mxu0 %v511
      %v2308 = vpop.f32.mrf.mxu0
      %v2309 = vadd.f32 %v2296, %v2308
      %v2310 = vpop.f32.mrf.mxu0
      %2311 = vdwg.mxu0
      %2312 = vmatpush.bf16.msra.mxu0 %v2062
      %2313 = vmatpush.bf16.msra.mxu0 %v2054
      %2314 = vmatpush.bf16.msra.mxu0 %v2046
      %2315 = vmatpush.bf16.msra.mxu0 %v2038
      %2316 = vmatpush.bf16.msra.mxu0 %v2030
      %2317 = vmatpush.bf16.msra.mxu0 %v2022
      %2318 = vmatpush.bf16.msra.mxu0 %v2014
      %2319 = vmatpush.bf16.msra.mxu0 %v2006
      %2320 = vmatmul.bf16.gmra.mxu0 %v510
      %v2321 = vpop.f32.mrf.mxu0
      %v2322 = vadd.f32 %v1487, %v2321
      %v2323 = vpop.f32.mrf.mxu0
      %2324 = vdwg.mxu0
      %2325 = vmatpush.bf16.msra.mxu0 %v2126
      %2326 = vmatpush.bf16.msra.mxu0 %v2118
      %2327 = vmatpush.bf16.msra.mxu0 %v2110
      %2328 = vmatpush.bf16.msra.mxu0 %v2102
      %2329 = vmatpush.bf16.msra.mxu0 %v2094
      %2330 = vmatpush.bf16.msra.mxu0 %v2086
      %2331 = vmatpush.bf16.msra.mxu0 %v2078
      %2332 = vmatpush.bf16.msra.mxu0 %v2070
      %2333 = vmatmul.bf16.gmra.mxu0 %v511
      %v2334 = vpop.f32.mrf.mxu0
      %v2335 = vadd.f32 %v2322, %v2334
      %v2336 = vpop.f32.mrf.mxu0
      %2337 = vdwg.mxu0
      %2338 = vmatpush.bf16.msra.mxu0 %v2063
      %2339 = vmatpush.bf16.msra.mxu0 %v2055
      %2340 = vmatpush.bf16.msra.mxu0 %v2047
      %2341 = vmatpush.bf16.msra.mxu0 %v2039
      %2342 = vmatpush.bf16.msra.mxu0 %v2031
      %2343 = vmatpush.bf16.msra.mxu0 %v2023
      %2344 = vmatpush.bf16.msra.mxu0 %v2015
      %2345 = vmatpush.bf16.msra.mxu0 %v2007
      %2346 = vmatmul.bf16.gmra.mxu0 %v510
      %v2347 = vpop.f32.mrf.mxu0
      %v2348 = vadd.f32 %v1513, %v2347
      %v2349 = vpop.f32.mrf.mxu0
      %2350 = vdwg.mxu0
      %2351 = vmatpush.bf16.msra.mxu0 %v2127
      %2352 = vmatpush.bf16.msra.mxu0 %v2119
      %2353 = vmatpush.bf16.msra.mxu0 %v2111
      %2354 = vmatpush.bf16.msra.mxu0 %v2103
      %2355 = vmatpush.bf16.msra.mxu0 %v2095
      %2356 = vmatpush.bf16.msra.mxu0 %v2087
      %2357 = vmatpush.bf16.msra.mxu0 %v2079
      %2358 = vmatpush.bf16.msra.mxu0 %v2071
      %2359 = vmatmul.bf16.gmra.mxu0 %v511
      %v2360 = vpop.f32.mrf.mxu0
      %v2361 = vadd.f32 %v2348, %v2360
      %v2362 = vpop.f32.mrf.mxu0
      %2363 = vdwg.mxu0
      %2364 = vmatpush.bf16.msra.mxu0 %v2064
      %2365 = vmatpush.bf16.msra.mxu0 %v2056
      %2366 = vmatpush.bf16.msra.mxu0 %v2048
      %2367 = vmatpush.bf16.msra.mxu0 %v2040
      %2368 = vmatpush.bf16.msra.mxu0 %v2032
      %2369 = vmatpush.bf16.msra.mxu0 %v2024
      %2370 = vmatpush.bf16.msra.mxu0 %v2016
      %2371 = vmatpush.bf16.msra.mxu0 %v2008
      %2372 = vmatmul.bf16.gmra.mxu0 %v510
      %v2373 = vpop.f32.mrf.mxu0
      %v2374 = vadd.f32 %v1539, %v2373
      %v2375 = vpop.f32.mrf.mxu0
      %2376 = vdwg.mxu0
      %2377 = vmatpush.bf16.msra.mxu0 %v2128
      %2378 = vmatpush.bf16.msra.mxu0 %v2120
      %2379 = vmatpush.bf16.msra.mxu0 %v2112
      %2380 = vmatpush.bf16.msra.mxu0 %v2104
      %2381 = vmatpush.bf16.msra.mxu0 %v2096
      %2382 = vmatpush.bf16.msra.mxu0 %v2088
      %2383 = vmatpush.bf16.msra.mxu0 %v2080
      %2384 = vmatpush.bf16.msra.mxu0 %v2072
      %2385 = vmatmul.bf16.gmra.mxu0 %v511
      %v2386 = vpop.f32.mrf.mxu0
      %v2387 = vadd.f32 %v2374, %v2386
      %v2388 = vpop.f32.mrf.mxu0
      %2389 = vdwg.mxu0
      %2390 = vmatpush.bf16.msra.mxu0 %v2065
      %2391 = vmatpush.bf16.msra.mxu0 %v2057
      %2392 = vmatpush.bf16.msra.mxu0 %v2049
      %2393 = vmatpush.bf16.msra.mxu0 %v2041
      %2394 = vmatpush.bf16.msra.mxu0 %v2033
      %2395 = vmatpush.bf16.msra.mxu0 %v2025
      %2396 = vmatpush.bf16.msra.mxu0 %v2017
      %2397 = vmatpush.bf16.msra.mxu0 %v2009
      %2398 = vmatmul.bf16.gmra.mxu0 %v510
      %v2399 = vpop.f32.mrf.mxu0
      %v2400 = vadd.f32 %v1565, %v2399
      %v2401 = vpop.f32.mrf.mxu0
      %2402 = vdwg.mxu0
      %2403 = vmatpush.bf16.msra.mxu0 %v2129
      %2404 = vmatpush.bf16.msra.mxu0 %v2121
      %2405 = vmatpush.bf16.msra.mxu0 %v2113
      %2406 = vmatpush.bf16.msra.mxu0 %v2105
      %2407 = vmatpush.bf16.msra.mxu0 %v2097
      %2408 = vmatpush.bf16.msra.mxu0 %v2089
      %2409 = vmatpush.bf16.msra.mxu0 %v2081
      %2410 = vmatpush.bf16.msra.mxu0 %v2073
      %2411 = vmatmul.bf16.gmra.mxu0 %v511
      %v2412 = vpop.f32.mrf.mxu0
      %v2413 = vadd.f32 %v2400, %v2412
      %v2414 = vpop.f32.mrf.mxu0
      %2415 = vdwg.mxu0
      %2416 = vmatpush.bf16.msra.mxu0 %v2066
      %2417 = vmatpush.bf16.msra.mxu0 %v2058
      %2418 = vmatpush.bf16.msra.mxu0 %v2050
      %2419 = vmatpush.bf16.msra.mxu0 %v2042
      %2420 = vmatpush.bf16.msra.mxu0 %v2034
      %2421 = vmatpush.bf16.msra.mxu0 %v2026
      %2422 = vmatpush.bf16.msra.mxu0 %v2018
      %2423 = vmatpush.bf16.msra.mxu0 %v2010
      %2424 = vmatmul.bf16.gmra.mxu0 %v510
      %v2425 = vpop.f32.mrf.mxu0
      %v2426 = vadd.f32 %v1591, %v2425
      %v2427 = vpop.f32.mrf.mxu0
      %2428 = vdwg.mxu0
      %2429 = vmatpush.bf16.msra.mxu0 %v2130
      %2430 = vmatpush.bf16.msra.mxu0 %v2122
      %2431 = vmatpush.bf16.msra.mxu0 %v2114
      %2432 = vmatpush.bf16.msra.mxu0 %v2106
      %2433 = vmatpush.bf16.msra.mxu0 %v2098
      %2434 = vmatpush.bf16.msra.mxu0 %v2090
      %2435 = vmatpush.bf16.msra.mxu0 %v2082
      %2436 = vmatpush.bf16.msra.mxu0 %v2074
      %2437 = vmatmul.bf16.gmra.mxu0 %v511
      %v2438 = vpop.f32.mrf.mxu0
      %v2439 = vadd.f32 %v2426, %v2438
      %v2440 = vpop.f32.mrf.mxu0
      %2441 = vdwg.mxu0
      %2442 = vmatpush.bf16.msra.mxu0 %v2067
      %2443 = vmatpush.bf16.msra.mxu0 %v2059
      %2444 = vmatpush.bf16.msra.mxu0 %v2051
      %2445 = vmatpush.bf16.msra.mxu0 %v2043
      %2446 = vmatpush.bf16.msra.mxu0 %v2035
      %2447 = vmatpush.bf16.msra.mxu0 %v2027
      %2448 = vmatpush.bf16.msra.mxu0 %v2019
      %2449 = vmatpush.bf16.msra.mxu0 %v2011
      %2450 = vmatmul.bf16.gmra.mxu0 %v510
      %v2451 = vpop.f32.mrf.mxu0
      %v2452 = vadd.f32 %v1617, %v2451
      %v2453 = vpop.f32.mrf.mxu0
      %2454 = vdwg.mxu0
      %2455 = vmatpush.bf16.msra.mxu0 %v2131
      %2456 = vmatpush.bf16.msra.mxu0 %v2123
      %2457 = vmatpush.bf16.msra.mxu0 %v2115
      %2458 = vmatpush.bf16.msra.mxu0 %v2107
      %2459 = vmatpush.bf16.msra.mxu0 %v2099
      %2460 = vmatpush.bf16.msra.mxu0 %v2091
      %2461 = vmatpush.bf16.msra.mxu0 %v2083
      %2462 = vmatpush.bf16.msra.mxu0 %v2075
      %2463 = vmatmul.bf16.gmra.mxu0 %v511
      %v2464 = vpop.f32.mrf.mxu0
      %v2465 = vadd.f32 %v2452, %v2464
      %v2466 = vpop.f32.mrf.mxu0
      %2467 = vdwg.mxu0
      %v2468 = vxor.u32 %v2283, 2147483648
      %v2469 = vxor.u32 %v2309, 2147483648
      %v2470 = vmul.f32 %v2468, 1.442695
      %v2471 = vpow.pop %v2470
      %v2472 = vmul.f32 %v2469, 1.442695
      %v2473 = vpow.pop %v2472
      %v2474 = vadd.f32 %v2471, 1.0
      %v2475 = vadd.f32 %v2473, 1.0
      %v2476 = vrcp.pop %v2474
      %v2477 = vmul.f32 %v2474, %v2476
      %v2478 = vsub.f32 1.0, %v2477
      %v2479 = vmul.f32 %v2476, %v2478
      %v2480 = vadd.f32 %v2476, %v2479
      %vm2481 = vweird.f32 %v2474
      %vm2482 = vweird.f32 %v2476
      %vm2483 = vmor %vm2481, %vm2482
      %v2484 = vsel %vm2483, %v2476, %v2480
      %v2485 = vand.u32 2147483647, %v2474
      %vm2486 = vcmp.eq.f32.partialorder %v2485, 8.507059e+37
      %v2487 = vand.u32 %v2474, 2147483648
      %v2488 = vor.u32 1.1754944e-38, %v2487
      %v2489 = vsel %vm2486, %v2488, %v2484
      %v2490 = vmul.f32 1.0, %v2489
      %v2491 = vrcp.pop %v2475
      %v2492 = vmul.f32 %v2475, %v2491
      %v2493 = vsub.f32 1.0, %v2492
      %v2494 = vmul.f32 %v2491, %v2493
      %v2495 = vadd.f32 %v2491, %v2494
      %vm2496 = vweird.f32 %v2475
      %vm2497 = vweird.f32 %v2491
      %vm2498 = vmor %vm2496, %vm2497
      %v2499 = vsel %vm2498, %v2491, %v2495
      %v2500 = vand.u32 2147483647, %v2475
      %vm2501 = vcmp.eq.f32.partialorder %v2500, 8.507059e+37
      %v2502 = vand.u32 %v2475, 2147483648
      %v2503 = vor.u32 1.1754944e-38, %v2502
      %v2504 = vsel %vm2501, %v2503, %v2499
      %v2505 = vmul.f32 1.0, %v2504
      %v2506 = vxor.u32 %v2335, 2147483648
      %v2507 = vxor.u32 %v2361, 2147483648
      %v2508 = vmul.f32 %v2506, 1.442695
      %v2509 = vpow.pop %v2508
      %v2510 = vmul.f32 %v2507, 1.442695
      %v2511 = vpow.pop %v2510
      %v2512 = vadd.f32 %v2509, 1.0
      %v2513 = vadd.f32 %v2511, 1.0
      %v2514 = vrcp.pop %v2512
      %v2515 = vmul.f32 %v2512, %v2514
      %v2516 = vsub.f32 1.0, %v2515
      %v2517 = vmul.f32 %v2514, %v2516
      %v2518 = vadd.f32 %v2514, %v2517
      %vm2519 = vweird.f32 %v2512
      %vm2520 = vweird.f32 %v2514
      %vm2521 = vmor %vm2519, %vm2520
      %v2522 = vsel %vm2521, %v2514, %v2518
      %v2523 = vand.u32 2147483647, %v2512
      %vm2524 = vcmp.eq.f32.partialorder %v2523, 8.507059e+37
      %v2525 = vand.u32 %v2512, 2147483648
      %v2526 = vor.u32 1.1754944e-38, %v2525
      %v2527 = vsel %vm2524, %v2526, %v2522
      %v2528 = vmul.f32 1.0, %v2527
      %v2529 = vrcp.pop %v2513
      %v2530 = vmul.f32 %v2513, %v2529
      %v2531 = vsub.f32 1.0, %v2530
      %v2532 = vmul.f32 %v2529, %v2531
      %v2533 = vadd.f32 %v2529, %v2532
      %vm2534 = vweird.f32 %v2513
      %vm2535 = vweird.f32 %v2529
      %vm2536 = vmor %vm2534, %vm2535
      %v2537 = vsel %vm2536, %v2529, %v2533
      %v2538 = vand.u32 2147483647, %v2513
      %vm2539 = vcmp.eq.f32.partialorder %v2538, 8.507059e+37
      %v2540 = vand.u32 %v2513, 2147483648
      %v2541 = vor.u32 1.1754944e-38, %v2540
      %v2542 = vsel %vm2539, %v2541, %v2537
      %v2543 = vmul.f32 1.0, %v2542
      %v2544 = vtanh.pop %v2387
      %v2545 = vtanh.pop %v2413
      %v2546 = vxor.u32 %v2439, 2147483648
      %v2547 = vxor.u32 %v2465, 2147483648
      %v2548 = vmul.f32 %v2546, 1.442695
      %v2549 = vpow.pop %v2548
      %v2550 = vmul.f32 %v2547, 1.442695
      %v2551 = vpow.pop %v2550
      %v2552 = vadd.f32 %v2549, 1.0
      %v2553 = vadd.f32 %v2551, 1.0
      %v2554 = vrcp.pop %v2552
      %v2555 = vmul.f32 %v2552, %v2554
      %v2556 = vsub.f32 1.0, %v2555
      %v2557 = vmul.f32 %v2554, %v2556
      %v2558 = vadd.f32 %v2554, %v2557
      %vm2559 = vweird.f32 %v2552
      %vm2560 = vweird.f32 %v2554
      %vm2561 = vmor %vm2559, %vm2560
      %v2562 = vsel %vm2561, %v2554, %v2558
      %v2563 = vand.u32 2147483647, %v2552
      %vm2564 = vcmp.eq.f32.partialorder %v2563, 8.507059e+37
      %v2565 = vand.u32 %v2552, 2147483648
      %v2566 = vor.u32 1.1754944e-38, %v2565
      %v2567 = vsel %vm2564, %v2566, %v2562
      %v2568 = vmul.f32 1.0, %v2567
      %v2569 = vrcp.pop %v2553
      %v2570 = vmul.f32 %v2553, %v2569
      %v2571 = vsub.f32 1.0, %v2570
      %v2572 = vmul.f32 %v2569, %v2571
      %v2573 = vadd.f32 %v2569, %v2572
      %vm2574 = vweird.f32 %v2553
      %vm2575 = vweird.f32 %v2569
      %vm2576 = vmor %vm2574, %vm2575
      %v2577 = vsel %vm2576, %v2569, %v2573
      %v2578 = vand.u32 2147483647, %v2553
      %vm2579 = vcmp.eq.f32.partialorder %v2578, 8.507059e+37
      %v2580 = vand.u32 %v2553, 2147483648
      %v2581 = vor.u32 1.1754944e-38, %v2580
      %v2582 = vsel %vm2579, %v2581, %v2577
      %v2583 = vmul.f32 1.0, %v2582
      %v2584 = vld [vmem:[%s416] sm:$0xff]
      %v2585 = vld [vmem:[%s416 + $0x8] sm:$0xff]
      %v2586 = vmul.f32 %v2528, %v2584
      %v2587 = vmul.f32 %v2543, %v2585
      %v2588 = vmul.f32 %v2490, %v2544
      %v2589 = vmul.f32 %v2505, %v2545
      %v2590 = vadd.f32 %v2586, %v2588
      %v2591 = vadd.f32 %v2587, %v2589
      %v2592 = vtanh.pop %v2590
      %v2593 = vtanh.pop %v2591
      %v2594 = vmul.f32 %v2568, %v2592
      %v2595 = vmul.f32 %v2583, %v2593
      %2596 = vst [vmem:[%s421] sm:$0xff] %v2594
      %2597 = vst [vmem:[%s421 + $0x8] sm:$0xff] %v2595
      %2598 = vst [vmem:[%s426] sm:$0xff] %v2590
      %2599 = vst [vmem:[%s426 + $0x8] sm:$0xff] %v2591
      %p2600 = scmp.lt.s32.totalorder %s22, 1
      %s2601 = scalar_select %p2600, %s22, 1
      %s2602 = smul.addr %s2601, 2
      %s2603 = smul.addr %s2602, 8
      %s2604 = scalar_lea.vmem %s9, %s2603
      %p2605 = scmp.lt.s32.totalorder %s22, 1
      %s2606 = scalar_select %p2605, %s22, 1
      %s2607 = smul.addr %s2606, 2
      %s2608 = smul.addr %s2607, 8
      %s2609 = scalar_lea.vmem %s10, %s2608
      // Predicated region
      $region57: #{geniepath_layer.1} parent=55 // pred_check
        %p2610 = pneg %p249
      $region58: #{geniepath_layer.1} parent=55 // pred_check_branch
        %2612 = sbr.rel (%p2610) target = $region60
      $region59: #{geniepath_layer.1} parent=55 // pred_region
        _
      $region60: #{geniepath_layer.1} parent=55 // pred_fallthru
        _
      // Predicated region
      $region61: #{geniepath_layer.1} parent=55 // pred_check
        %p2613 = pneg %p275
      $region62: #{geniepath_layer.1} parent=55 // pred_check_branch
        %2615 = sbr.rel (%p2613) target = $region64
      $region63: #{geniepath_layer.1} parent=55 // pred_region
        _
      $region64: #{geniepath_layer.1} parent=55 // pred_fallthru
        _
    $region56: #{geniepath_layer.1} parent=5 // pred_fallthru
      _
    %p2616 = scmp.le.s32.totalorder 2, %s17
    // Predicated region
    $region65: #{geniepath_layer.1} parent=5 // pred_check
      %p2617 = pneg %p2616
    $region66: #{geniepath_layer.1} parent=5 // pred_check_branch
      %2619 = sbr.rel (%p2617) target = $region68
    $region67: #{geniepath_layer.1} parent=5 // pred_region
      %s2620 = ssub.s32 %s17, 2
      // Predicated region
      $region69: #{geniepath_layer.1} parent=67 // pred_check
        %p2621 = pneg %p255
      $region70: #{geniepath_layer.1} parent=67 // pred_check_branch
        %2623 = sbr.rel (%p2621) target = $region72
      $region71: #{geniepath_layer.1} parent=67 // pred_region
        %p2624 = scmp.lt.s32.totalorder %s23, 1
        %s2625 = scalar_select %p2624, %s23, 1
        %s2626 = smul.addr %s2625, 2
        %s2627 = smul.addr %s2626, 8
        %s2628 = scalar_lea.vmem %s9, %s2627
      $region72: #{geniepath_layer.1} parent=67 // pred_fallthru
        _
      // Predicated region
      $region73: #{geniepath_layer.1} parent=67 // pred_check
        %p2629 = pneg %p281
      $region74: #{geniepath_layer.1} parent=67 // pred_check_branch
        %2631 = sbr.rel (%p2629) target = $region76
      $region75: #{geniepath_layer.1} parent=67 // pred_region
        %p2632 = scmp.lt.s32.totalorder %s23, 1
        %s2633 = scalar_select %p2632, %s23, 1
        %s2634 = smul.addr %s2633, 2
        %s2635 = smul.addr %s2634, 8
        %s2636 = scalar_lea.vmem %s10, %s2635
      $region76: #{geniepath_layer.1} parent=67 // pred_fallthru
        _
    $region68: #{geniepath_layer.1} parent=5 // pred_fallthru
      _
  $region6: #{geniepath_layer.1} parent=0 // loop_footer
    %s21 = sadd.s32 1, %s17
  $region7: #{geniepath_layer.1} parent=0 // loop_footer_branch
    %16 = sbr.rel target = $region3
  $region8: #{geniepath_layer.1} parent=0 // loop_exit
    _

</llo_original>
